<compile_context>
chip_gen: v7x
topology: tpu7x:2x2x1
jax: 0.10.0
libtpu: 0.0.40
codegen_flags: <defaults>
</compile_context>

<pallas_src>
import functools

import jax
import jax.numpy as jnp
from jax.experimental import pallas as pl
from jax.experimental.pallas import tpu as pltpu


LANES = 128          # every matmul N (channels / features) padded to a full lane tile
NUM_CLASSES = 10

# conv geometry (CIFAR-10: 32x32x3 -> conv5 -> 28x28x6 -> pool -> 14x14x6
#                               -> conv5 -> 10x10x16 -> pool -> 5x5x16)
K1, KP1 = 3 * 25, 80        # conv1 contraction (kh,kw,cin), padded to mult of 8
K2, KP2 = 6 * 25, 152       # conv2 contraction
Q1, QP1 = 14 * 14, 200      # pooled rows per image (padded to mult of 8)
Q2, QP2 = 5 * 5, 32

_VMEM = pl.BlockSpec(memory_space=pltpu.MemorySpace.VMEM)


# ----------------------------- Pallas kernels ------------------------------

def _conv_relu_pool_kernel(x_ref, w_ref, b_ref, o_ref):
    """One image: im2col matmul + bias + ReLU + fused 2x2/2 max-pool.

    x_ref: [1, 4*Qp, K]  bf16 im2col rows, grouped as 4 quadrants (h%2, w%2),
                         each quadrant in pooled (ph, pw) order, zero-row padded to Qp.
    w_ref: [K, 128]      bf16 packed weights, rows ordered (kh*5+kw)*Cin + cin.
    b_ref: [1, 128]      f32 bias (zero in pad lanes).
    o_ref: [1, Qp, 128]  bf16 pooled activations; rows >= Q are garbage (sliced off).
    """
    qp = o_ref.shape[1]
    d = jnp.dot(x_ref[0], w_ref[...], preferred_element_type=jnp.float32)  # [4*qp,128]
    # Elementwise max across the four (h%2, w%2) quadrants == 2x2 window max,
    # already stride-2 decimated.  Quadrant boundaries are multiples of 8 rows.
    m = jnp.maximum(jnp.maximum(d[0:qp], d[qp:2 * qp]),
                    jnp.maximum(d[2 * qp:3 * qp], d[3 * qp:4 * qp]))
    # max/ReLU commute with the shared bias add, so bias+ReLU ride the 4x
    # smaller pooled slab.
    o_ref[0] = jnp.maximum(m + b_ref[...], 0.0).astype(o_ref.dtype)


def _mlp_head_kernel(x_ref, w1_ref, b1_ref, w2_ref, b2_ref, w3_ref, b3_ref,
                     o_ref, *, num_classes):
    """Fused fc1+ReLU -> fc2+ReLU -> fc3 -> log_softmax (all N padded to 128 lanes)."""
    h = jnp.dot(x_ref[...], w1_ref[...], preferred_element_type=jnp.float32)
    h = jnp.maximum(h + b1_ref[...], 0.0).astype(jnp.bfloat16)
    h = jnp.dot(h, w2_ref[...], preferred_element_type=jnp.float32)
    h = jnp.maximum(h + b2_ref[...], 0.0).astype(jnp.bfloat16)
    logits = jnp.dot(h, w3_ref[...], preferred_element_type=jnp.float32) + b3_ref[...]

    col = jax.lax.broadcasted_iota(jnp.int32, logits.shape, 1)
    logits = jnp.where(col < num_classes, logits, -1e30)   # mask pad lanes
    m = jnp.max(logits, axis=-1, keepdims=True)
    s = logits - m
    lse = jnp.log(jnp.sum(jnp.exp(s), axis=-1, keepdims=True))
    o_ref[...] = (s - lse).astype(o_ref.dtype)


# ------------------------------ kernel wrappers -----------------------------

def conv_relu_pool(patches, w, b, *, qp):
    """patches: [B, 4*qp, K] bf16; w: [K, 128] bf16; b: [1,128] f32 -> [B, qp, 128] bf16."""
    B, R, Kc = patches.shape
    return pl.pallas_call(
        _conv_relu_pool_kernel,
        out_shape=jax.ShapeDtypeStruct((B, qp, LANES), jnp.bfloat16),
        grid=(B,),
        in_specs=[
            pl.BlockSpec((1, R, Kc), lambda i: (i, 0, 0)),
            pl.BlockSpec((Kc, LANES), lambda i: (0, 0)),
            pl.BlockSpec((1, LANES), lambda i: (0, 0)),
        ],
        out_specs=pl.BlockSpec((1, qp, LANES), lambda i: (i, 0, 0)),
        compiler_params=pltpu.CompilerParams(
            dimension_semantics=("parallel",),          # v7x: shard batch over 2 TCs
            vmem_limit_bytes=32 * 1024 * 1024),          # portable to v7x's 64 MiB VMEM
    )(patches, w, b)


def mlp_head(x, w1, b1, w2, b2, w3, b3):
    """x: [B, 400] bf16 -> [B, 128] f32 log-probs (valid classes in lanes [0, 10))."""
    B = x.shape[0]
    return pl.pallas_call(
        functools.partial(_mlp_head_kernel, num_classes=NUM_CLASSES),
        out_shape=jax.ShapeDtypeStruct((B, LANES), jnp.float32),
        in_specs=[_VMEM] * 7,
        out_specs=_VMEM,
    )(x, w1, b1, w2, b2, w3, b3)


# --------------------- XLA-side packing / im2col glue -----------------------

def _im2col_nhwc(x, k):
    """x: [B,H,W,C] -> [B, Ho, Wo, k*k*C] valid patches, feature order (kh, kw, c)."""
    B, H, W, C = x.shape
    ho, wo = H - k + 1, W - k + 1
    cols = [x[:, kh:kh + ho, kw:kw + wo, :] for kh in range(k) for kw in range(k)]
    return jnp.concatenate(cols, axis=-1)


def _quadrant_rows(p, qp):
    """[B, Ho, Wo, K] (Ho, Wo even) -> [B, 4*qp, K].

    Rows grouped by pooling quadrant q = 2*(h%2) + (w%2); within each quadrant
    rows run over pooled (ph, pw); each quadrant zero-padded to qp rows so the
    kernel's quadrant slices stay (8,128)-tile aligned."""
    B, Ho, Wo, Kc = p.shape
    hp, wp = Ho // 2, Wo // 2
    q = p.reshape(B, hp, 2, wp, 2, Kc).transpose(0, 2, 4, 1, 3, 5)
    q = q.reshape(B, 4, hp * wp, Kc)
    q = jnp.pad(q, ((0, 0), (0, 0), (0, qp - hp * wp), (0, 0)))
    return q.reshape(B, 4 * qp, Kc)


def _pack_conv_w(w, kc):
    """torch conv weight [Cout, Cin, k, k] -> [kc, 128] bf16, rows (kh*k+kw)*Cin + c."""
    cout, cin, k, _ = w.shape
    t = jnp.transpose(w, (2, 3, 1, 0)).reshape(k * k * cin, cout)
    return jnp.pad(t, ((0, kc - k * k * cin), (0, LANES - cout))).astype(jnp.bfloat16)


def _pack_fc1_w(w):
    """torch fc1 [120, 400] (cols c*25 + h*5 + w) -> [400, 128] with rows (h*5+w)*16 + c."""
    t = w.reshape(120, 16, 5, 5).transpose(2, 3, 1, 0).reshape(400, 120)
    return jnp.pad(t, ((0, 0), (0, LANES - 120))).astype(jnp.bfloat16)


def _pack_fc_w(w, rows):
    """torch Linear weight [out, in] -> [rows, 128] bf16 (row = input feature)."""
    o, i = w.shape
    return jnp.pad(w.T, ((0, rows - i), (0, LANES - o))).astype(jnp.bfloat16)


def _pad_bias(b):
    return jnp.pad(b, (0, LANES - b.shape[0])).reshape(1, LANES).astype(jnp.float32)


# ------------------------------ the model ----------------------------------

def init_params(key):
    """Deterministic params, PyTorch-style uniform(-1/sqrt(fan_in), 1/sqrt(fan_in))."""
    def u(k, shape, fan_in):
        bound = 1.0 / jnp.sqrt(float(fan_in))
        return jax.random.uniform(k, shape, jnp.float32, -bound, bound)

    ks = jax.random.split(key, 10)
    return {
        "conv1_w": u(ks[0], (6, 3, 5, 5), 3 * 5 * 5),
        "conv1_b": u(ks[1], (6,), 3 * 5 * 5),
        "conv2_w": u(ks[2], (16, 6, 5, 5), 6 * 5 * 5),
        "conv2_b": u(ks[3], (16,), 6 * 5 * 5),
        "fc1_w": u(ks[4], (120, 400), 400),
        "fc1_b": u(ks[5], (120,), 400),
        "fc2_w": u(ks[6], (84, 120), 120),
        "fc2_b": u(ks[7], (84,), 120),
        "fc3_w": u(ks[8], (10, 84), 84),
        "fc3_b": u(ks[9], (10,), 84),
    }


@jax.jit
def net_cifar10_forward(x, params):
    """x: [B, 3, 32, 32] float32 (NCHW, like torch). Returns [B, 10] log-probs."""
    B = x.shape[0]

    # Pack params into lane-dense bf16 kernel layouts (tiny XLA work).
    w1 = _pack_conv_w(params["conv1_w"], KP1)      # [80, 128]
    b1 = _pad_bias(params["conv1_b"])
    w2 = _pack_conv_w(params["conv2_w"], KP2)      # [152, 128]
    b2 = _pad_bias(params["conv2_b"])
    f1 = _pack_fc1_w(params["fc1_w"])              # [400, 128]
    g1 = _pad_bias(params["fc1_b"])
    f2 = _pack_fc_w(params["fc2_w"], LANES)        # [128, 128]
    g2 = _pad_bias(params["fc2_b"])
    f3 = _pack_fc_w(params["fc3_w"], LANES)        # [128, 128]
    g3 = _pad_bias(params["fc3_b"])

    # conv1 + ReLU + pool (pooled output emitted directly by the kernel)
    xn = jnp.transpose(x, (0, 2, 3, 1))                              # [B,32,32,3]
    p = _im2col_nhwc(xn, 5)                                          # [B,28,28,75]
    p = jnp.pad(p, ((0, 0), (0, 0), (0, 0), (0, KP1 - K1)))
    p = _quadrant_rows(p, QP1).astype(jnp.bfloat16)                  # [B,800,80]
    y1 = conv_relu_pool(p, w1, b1, qp=QP1)                           # [B,200,128] bf16
    a1 = y1[:, :Q1, :6].reshape(B, 14, 14, 6)                        # real channels only

    # conv2 + ReLU + pool
    p = _im2col_nhwc(a1, 5)                                          # [B,10,10,150]
    p = jnp.pad(p, ((0, 0), (0, 0), (0, 0), (0, KP2 - K2)))
    p = _quadrant_rows(p, QP2).astype(jnp.bfloat16)                  # [B,128,152]
    y2 = conv_relu_pool(p, w2, b2, qp=QP2)                           # [B,32,128] bf16
    a0 = y2[:, :Q2, :16].reshape(B, 16 * 5 * 5)                      # (h*5+w)*16+c order

    # fused fc1+fc2+fc3+log_softmax (torch (C,H,W) flatten order folded into f1)
    out = mlp_head(a0, f1, g1, f2, g2, f3, g3)                       # [B, 128]
    return out[:, :NUM_CLASSES]


# -------------------------- pure-JAX reference ------------------------------

def _reference_forward(x, params):
    def conv(x, w, b):
        y = jax.lax.conv_general_dilated(
            x, w, window_strides=(1, 1), padding="VALID",
            dimension_numbers=("NCHW", "OIHW", "NCHW"))
        return jax.nn.relu(y + b[None, :, None, None])

    def pool(x):
        B, C, H, W = x.shape
        return jnp.max(x.reshape(B, C, H // 2, 2, W // 2, 2), axis=(3, 5))

    x = pool(conv(x, params["conv1_w"], params["conv1_b"]))
    x = pool(conv(x, params["conv2_w"], params["conv2_b"]))
    x = x.reshape(x.shape[0], -1)
    x = jax.nn.relu(x @ params["fc1_w"].T + params["fc1_b"])
    x = jax.nn.relu(x @ params["fc2_w"].T + params["fc2_b"])
    x = x @ params["fc3_w"].T + params["fc3_b"]
    return jax.nn.log_softmax(x, axis=-1)


if __name__ == "__main__":
    key = jax.random.PRNGKey(0)
    k_x, k_p = jax.random.split(key)

    # CIFAR-10 geometry is required by the fixed 16*5*5 flatten: 32x32 RGB.
    x = jax.random.normal(k_x, (2, 3, 32, 32), jnp.float32)
    params = init_params(k_p)

    out = jax.block_until_ready(net_cifar10_forward(x, params))
    assert out.shape == (2, 10), out.shape

    # log_softmax rows should exponentiate-sum to ~1
    row_sums = jnp.exp(out).sum(axis=1)
    assert bool(jnp.all(jnp.abs(row_sums - 1.0) < 1e-4)), row_sums

    # numerical cross-check against a pure-JAX f32 reference of the torch module
    # (kernel path uses bf16 matmul inputs with f32 accumulation -> looser tol)
    ref = jax.block_until_ready(_reference_forward(x, params))
    assert bool(jnp.allclose(out, ref, atol=3e-2, rtol=3e-2)), (out, ref)

    print("KERNEL_OK")
</pallas_src>

<mosaic_0001>
module attributes {stable_mosaic.version = 11 : i64} {
  func.func @_conv_relu_pool_kernel(%arg0: i32, %arg1: memref<1x800x80xbf16, #tpu.memory_space<vmem>>, %arg2: memref<80x128xbf16, #tpu.memory_space<vmem>>, %arg3: memref<1x128xf32, #tpu.memory_space<vmem>>, %arg4: memref<1x200x128xbf16, #tpu.memory_space<vmem>>) attributes {dimension_semantics = [#tpu.dimension_semantics<parallel>], iteration_bounds = array<i64: 2>, scalar_prefetch = 0 : i64, scratch_operands = 0 : i64, tpu.core_type = #tpu.core_type<tc>, window_params = [{transform_indices = @transform_0, window_bounds = array<i64: 1, 800, 80>}, {pipeline_mode = #tpu.pipeline_mode<synchronous>, transform_indices = @transform_1, window_bounds = array<i64: 80, 128>}, {pipeline_mode = #tpu.pipeline_mode<synchronous>, transform_indices = @transform_2, window_bounds = array<i64: 1, 128>}, {transform_indices = @transform_3, window_bounds = array<i64: 1, 200, 128>}]} {
    %c0 = arith.constant 0 : index
    %c0_0 = arith.constant 0 : index
    %c0_1 = arith.constant 0 : index
    %0 = vector.load %arg1[%c0, %c0_0, %c0_1] : memref<1x800x80xbf16, #tpu.memory_space<vmem>>, vector<1x800x80xbf16>
    %1 = vector.shape_cast %0 : vector<1x800x80xbf16> to vector<800x80xbf16>
    %c0_2 = arith.constant 0 : index
    %c0_3 = arith.constant 0 : index
    %2 = vector.load %arg2[%c0_2, %c0_3] : memref<80x128xbf16, #tpu.memory_space<vmem>>, vector<80x128xbf16>
    %cst = arith.constant dense<0.000000e+00> : vector<800x128xf32>
    %3 = tpu.matmul %1, %2, %cst {dimension_numbers = #tpu.dot_dimension_numbers<[1], [0], [0], [1], [0, 0, 1, 1], [], []>} : vector<800x80xbf16>, vector<80x128xbf16>, vector<800x128xf32> -> vector<800x128xf32>
    %4 = vector.extract_strided_slice %3 {offsets = [0, 0], sizes = [200, 128], strides = [1, 1]} : vector<800x128xf32> to vector<200x128xf32>
    %5 = vector.extract_strided_slice %3 {offsets = [200, 0], sizes = [200, 128], strides = [1, 1]} : vector<800x128xf32> to vector<200x128xf32>
    %6 = arith.maximumf %4, %5 : vector<200x128xf32>
    %7 = vector.extract_strided_slice %3 {offsets = [400, 0], sizes = [200, 128], strides = [1, 1]} : vector<800x128xf32> to vector<200x128xf32>
    %8 = vector.extract_strided_slice %3 {offsets = [600, 0], sizes = [200, 128], strides = [1, 1]} : vector<800x128xf32> to vector<200x128xf32>
    %9 = arith.maximumf %7, %8 : vector<200x128xf32>
    %10 = arith.maximumf %6, %9 : vector<200x128xf32>
    %c0_4 = arith.constant 0 : index
    %c0_5 = arith.constant 0 : index
    %11 = vector.load %arg3[%c0_4, %c0_5] : memref<1x128xf32, #tpu.memory_space<vmem>>, vector<1x128xf32>
    %12 = vector.broadcast %11 : vector<1x128xf32> to vector<200x128xf32>
    %13 = arith.addf %10, %12 : vector<200x128xf32>
    %cst_6 = arith.constant 0.000000e+00 : f32
    %14 = vector.broadcast %cst_6 : f32 to vector<200x128xf32>
    %15 = arith.maximumf %13, %14 : vector<200x128xf32>
    %16 = arith.truncf %15 : vector<200x128xf32> to vector<200x128xbf16>
    %c0_7 = arith.constant 0 : index
    %c0_8 = arith.constant 0 : index
    %c0_9 = arith.constant 0 : index
    %17 = vector.load %arg4[%c0_7, %c0_8, %c0_9] : memref<1x200x128xbf16, #tpu.memory_space<vmem>>, vector<1x200x128xbf16>
    %18 = vector.shape_cast %17 : vector<1x200x128xbf16> to vector<200x128xbf16>
    %19 = vector.shape_cast %16 : vector<200x128xbf16> to vector<1x200x128xbf16>
    tpu.vector_store %arg4[%c0_7, %c0_8, %c0_9], %19 {strides = array<i32>} : memref<1x200x128xbf16, #tpu.memory_space<vmem>>, vector<1x200x128xbf16>,
    return
  }
  func.func @transform_0(%arg0: i32) -> (i32, i32, i32) {
    %c0_i32 = arith.constant 0 : i32
    %c0_i32_0 = arith.constant 0 : i32
    %c0_i32_1 = arith.constant 0 : i32
    return %arg0, %c0_i32, %c0_i32_0 : i32, i32, i32
  }
  func.func @transform_1(%arg0: i32) -> (i32, i32) {
    %c0_i32 = arith.constant 0 : i32
    %c0_i32_0 = arith.constant 0 : i32
    %c0_i32_1 = arith.constant 0 : i32
    return %c0_i32, %c0_i32_0 : i32, i32
  }
  func.func @transform_2(%arg0: i32) -> (i32, i32) {
    %c0_i32 = arith.constant 0 : i32
    %c0_i32_0 = arith.constant 0 : i32
    %c0_i32_1 = arith.constant 0 : i32
    return %c0_i32, %c0_i32_0 : i32, i32
  }
  func.func @transform_3(%arg0: i32) -> (i32, i32, i32) {
    %c0_i32 = arith.constant 0 : i32
    %c0_i32_0 = arith.constant 0 : i32
    %c0_i32_1 = arith.constant 0 : i32
    return %arg0, %c0_i32, %c0_i32_0 : i32, i32, i32
  }
}

module attributes {stable_mosaic.version = 11 : i64} {
  func.func @_conv_relu_pool_kernel(%arg0: i32, %arg1: memref<1x128x152xbf16, #tpu.memory_space<vmem>>, %arg2: memref<152x128xbf16, #tpu.memory_space<vmem>>, %arg3: memref<1x128xf32, #tpu.memory_space<vmem>>, %arg4: memref<1x32x128xbf16, #tpu.memory_space<vmem>>) attributes {dimension_semantics = [#tpu.dimension_semantics<parallel>], iteration_bounds = array<i64: 2>, scalar_prefetch = 0 : i64, scratch_operands = 0 : i64, tpu.core_type = #tpu.core_type<tc>, window_params = [{transform_indices = @transform_0, window_bounds = array<i64: 1, 128, 152>}, {pipeline_mode = #tpu.pipeline_mode<synchronous>, transform_indices = @transform_1, window_bounds = array<i64: 152, 128>}, {pipeline_mode = #tpu.pipeline_mode<synchronous>, transform_indices = @transform_2, window_bounds = array<i64: 1, 128>}, {transform_indices = @transform_3, window_bounds = array<i64: 1, 32, 128>}]} {
    %c0 = arith.constant 0 : index
    %c0_0 = arith.constant 0 : index
    %c0_1 = arith.constant 0 : index
    %0 = vector.load %arg1[%c0, %c0_0, %c0_1] : memref<1x128x152xbf16, #tpu.memory_space<vmem>>, vector<1x128x152xbf16>
    %1 = vector.shape_cast %0 : vector<1x128x152xbf16> to vector<128x152xbf16>
    %c0_2 = arith.constant 0 : index
    %c0_3 = arith.constant 0 : index
    %2 = vector.load %arg2[%c0_2, %c0_3] : memref<152x128xbf16, #tpu.memory_space<vmem>>, vector<152x128xbf16>
    %cst = arith.constant dense<0.000000e+00> : vector<128x128xf32>
    %3 = tpu.matmul %1, %2, %cst {dimension_numbers = #tpu.dot_dimension_numbers<[1], [0], [0], [1], [0, 0, 1, 1], [], []>} : vector<128x152xbf16>, vector<152x128xbf16>, vector<128x128xf32> -> vector<128x128xf32>
    %4 = vector.extract_strided_slice %3 {offsets = [0, 0], sizes = [32, 128], strides = [1, 1]} : vector<128x128xf32> to vector<32x128xf32>
    %5 = vector.extract_strided_slice %3 {offsets = [32, 0], sizes = [32, 128], strides = [1, 1]} : vector<128x128xf32> to vector<32x128xf32>
    %6 = arith.maximumf %4, %5 : vector<32x128xf32>
    %7 = vector.extract_strided_slice %3 {offsets = [64, 0], sizes = [32, 128], strides = [1, 1]} : vector<128x128xf32> to vector<32x128xf32>
    %8 = vector.extract_strided_slice %3 {offsets = [96, 0], sizes = [32, 128], strides = [1, 1]} : vector<128x128xf32> to vector<32x128xf32>
    %9 = arith.maximumf %7, %8 : vector<32x128xf32>
    %10 = arith.maximumf %6, %9 : vector<32x128xf32>
    %c0_4 = arith.constant 0 : index
    %c0_5 = arith.constant 0 : index
    %11 = vector.load %arg3[%c0_4, %c0_5] : memref<1x128xf32, #tpu.memory_space<vmem>>, vector<1x128xf32>
    %12 = vector.broadcast %11 : vector<1x128xf32> to vector<32x128xf32>
    %13 = arith.addf %10, %12 : vector<32x128xf32>
    %cst_6 = arith.constant 0.000000e+00 : f32
    %14 = vector.broadcast %cst_6 : f32 to vector<32x128xf32>
    %15 = arith.maximumf %13, %14 : vector<32x128xf32>
    %16 = arith.truncf %15 : vector<32x128xf32> to vector<32x128xbf16>
    %c0_7 = arith.constant 0 : index
    %c0_8 = arith.constant 0 : index
    %c0_9 = arith.constant 0 : index
    %17 = vector.load %arg4[%c0_7, %c0_8, %c0_9] : memref<1x32x128xbf16, #tpu.memory_space<vmem>>, vector<1x32x128xbf16>
    %18 = vector.shape_cast %17 : vector<1x32x128xbf16> to vector<32x128xbf16>
    %19 = vector.shape_cast %16 : vector<32x128xbf16> to vector<1x32x128xbf16>
    tpu.vector_store %arg4[%c0_7, %c0_8, %c0_9], %19 {strides = array<i32>} : memref<1x32x128xbf16, #tpu.memory_space<vmem>>, vector<1x32x128xbf16>,
    return
  }
  func.func @transform_0(%arg0: i32) -> (i32, i32, i32) {
    %c0_i32 = arith.constant 0 : i32
    %c0_i32_0 = arith.constant 0 : i32
    %c0_i32_1 = arith.constant 0 : i32
    return %arg0, %c0_i32, %c0_i32_0 : i32, i32, i32
  }
  func.func @transform_1(%arg0: i32) -> (i32, i32) {
    %c0_i32 = arith.constant 0 : i32
    %c0_i32_0 = arith.constant 0 : i32
    %c0_i32_1 = arith.constant 0 : i32
    return %c0_i32, %c0_i32_0 : i32, i32
  }
  func.func @transform_2(%arg0: i32) -> (i32, i32) {
    %c0_i32 = arith.constant 0 : i32
    %c0_i32_0 = arith.constant 0 : i32
    %c0_i32_1 = arith.constant 0 : i32
    return %c0_i32, %c0_i32_0 : i32, i32
  }
  func.func @transform_3(%arg0: i32) -> (i32, i32, i32) {
    %c0_i32 = arith.constant 0 : i32
    %c0_i32_0 = arith.constant 0 : i32
    %c0_i32_1 = arith.constant 0 : i32
    return %arg0, %c0_i32, %c0_i32_0 : i32, i32, i32
  }
}

module attributes {stable_mosaic.version = 11 : i64} {
  func.func @_mlp_head_kernel(%arg0: memref<2x400xbf16, #tpu.memory_space<vmem>>, %arg1: memref<400x128xbf16, #tpu.memory_space<vmem>>, %arg2: memref<1x128xf32, #tpu.memory_space<vmem>>, %arg3: memref<128x128xbf16, #tpu.memory_space<vmem>>, %arg4: memref<1x128xf32, #tpu.memory_space<vmem>>, %arg5: memref<128x128xbf16, #tpu.memory_space<vmem>>, %arg6: memref<1x128xf32, #tpu.memory_space<vmem>>, %arg7: memref<2x128xf32, #tpu.memory_space<vmem>>) attributes {dimension_semantics = [], scalar_prefetch = 0 : i64, scratch_operands = 0 : i64, tpu.core_type = #tpu.core_type<tc>} {
    %c0 = arith.constant 0 : index
    %c0_0 = arith.constant 0 : index
    %0 = vector.load %arg0[%c0, %c0_0] : memref<2x400xbf16, #tpu.memory_space<vmem>>, vector<2x400xbf16>
    %c0_1 = arith.constant 0 : index
    %c0_2 = arith.constant 0 : index
    %1 = vector.load %arg1[%c0_1, %c0_2] : memref<400x128xbf16, #tpu.memory_space<vmem>>, vector<400x128xbf16>
    %cst = arith.constant dense<0.000000e+00> : vector<2x128xf32>
    %2 = tpu.matmul %0, %1, %cst {dimension_numbers = #tpu.dot_dimension_numbers<[1], [0], [0], [1], [0, 0, 1, 1], [], []>} : vector<2x400xbf16>, vector<400x128xbf16>, vector<2x128xf32> -> vector<2x128xf32>
    %c0_3 = arith.constant 0 : index
    %c0_4 = arith.constant 0 : index
    %3 = vector.load %arg2[%c0_3, %c0_4] : memref<1x128xf32, #tpu.memory_space<vmem>>, vector<1x128xf32>
    %4 = vector.broadcast %3 : vector<1x128xf32> to vector<2x128xf32>
    %5 = arith.addf %2, %4 : vector<2x128xf32>
    %cst_5 = arith.constant 0.000000e+00 : f32
    %6 = vector.broadcast %cst_5 : f32 to vector<2x128xf32>
    %7 = arith.maximumf %5, %6 : vector<2x128xf32>
    %8 = arith.truncf %7 : vector<2x128xf32> to vector<2x128xbf16>
    %c0_6 = arith.constant 0 : index
    %c0_7 = arith.constant 0 : index
    %9 = vector.load %arg3[%c0_6, %c0_7] : memref<128x128xbf16, #tpu.memory_space<vmem>>, vector<128x128xbf16>
    %cst_8 = arith.constant dense<0.000000e+00> : vector<2x128xf32>
    %10 = tpu.matmul %8, %9, %cst_8 {dimension_numbers = #tpu.dot_dimension_numbers<[1], [0], [0], [1], [0, 0, 1, 1], [], []>} : vector<2x128xbf16>, vector<128x128xbf16>, vector<2x128xf32> -> vector<2x128xf32>
    %c0_9 = arith.constant 0 : index
    %c0_10 = arith.constant 0 : index
    %11 = vector.load %arg4[%c0_9, %c0_10] : memref<1x128xf32, #tpu.memory_space<vmem>>, vector<1x128xf32>
    %12 = vector.broadcast %11 : vector<1x128xf32> to vector<2x128xf32>
    %13 = arith.addf %10, %12 : vector<2x128xf32>
    %cst_11 = arith.constant 0.000000e+00 : f32
    %14 = vector.broadcast %cst_11 : f32 to vector<2x128xf32>
    %15 = arith.maximumf %13, %14 : vector<2x128xf32>
    %16 = arith.truncf %15 : vector<2x128xf32> to vector<2x128xbf16>
    %c0_12 = arith.constant 0 : index
    %c0_13 = arith.constant 0 : index
    %17 = vector.load %arg5[%c0_12, %c0_13] : memref<128x128xbf16, #tpu.memory_space<vmem>>, vector<128x128xbf16>
    %cst_14 = arith.constant dense<0.000000e+00> : vector<2x128xf32>
    %18 = tpu.matmul %16, %17, %cst_14 {dimension_numbers = #tpu.dot_dimension_numbers<[1], [0], [0], [1], [0, 0, 1, 1], [], []>} : vector<2x128xbf16>, vector<128x128xbf16>, vector<2x128xf32> -> vector<2x128xf32>
    %c0_15 = arith.constant 0 : index
    %c0_16 = arith.constant 0 : index
    %19 = vector.load %arg6[%c0_15, %c0_16] : memref<1x128xf32, #tpu.memory_space<vmem>>, vector<1x128xf32>
    %20 = vector.broadcast %19 : vector<1x128xf32> to vector<2x128xf32>
    %21 = arith.addf %18, %20 : vector<2x128xf32>
    %22 = tpu.iota {dimensions = array<i32: 1>} : vector<2x128xi32>
    %c10_i32 = arith.constant 10 : i32
    %23 = vector.broadcast %c10_i32 : i32 to vector<2x128xi32>
    %24 = arith.cmpi slt, %22, %23 : vector<2x128xi32>
    %cst_17 = arith.constant -1.000000e+30 : f32
    %25 = vector.broadcast %cst_17 : f32 to vector<2x128xf32>
    %26 = arith.select %24, %21, %25 : vector<2x128xi1>, vector<2x128xf32>
    %cst_18 = arith.constant dense<0xFF800000> : vector<2xf32>
    %27 = vector.multi_reduction <maximumf>, %26, %cst_18 [1] : vector<2x128xf32> to vector<2xf32>
    %28 = vector.shape_cast %27 : vector<2xf32> to vector<2x1xf32>
    %29 = vector.broadcast %28 : vector<2x1xf32> to vector<2x128xf32>
    %30 = arith.subf %26, %29 : vector<2x128xf32>
    %31 = math.exp %30 : vector<2x128xf32>
    %cst_19 = arith.constant dense<0.000000e+00> : vector<2xf32>
    %32 = vector.multi_reduction <add>, %31, %cst_19 [1] : vector<2x128xf32> to vector<2xf32>
    %33 = vector.shape_cast %32 : vector<2xf32> to vector<2x1xf32>
    %34 = math.log %33 : vector<2x1xf32>
    %35 = vector.broadcast %34 : vector<2x1xf32> to vector<2x128xf32>
    %36 = arith.subf %30, %35 : vector<2x128xf32>
    %c0_20 = arith.constant 0 : index
    %c0_21 = arith.constant 0 : index
    %37 = vector.load %arg7[%c0_20, %c0_21] : memref<2x128xf32, #tpu.memory_space<vmem>>, vector<2x128xf32>
    tpu.vector_store %arg7[%c0_20, %c0_21], %36 {strides = array<i32>} : memref<2x128xf32, #tpu.memory_space<vmem>>, vector<2x128xf32>,
    return
  }
}

</mosaic_0001>

<llo_original>
// kernel: net_cifar10_forward.3
$region0: #{net_cifar10_forward.3}
  #allocation0 [shape = 'u32[]', space=smem, size = 0x4, offset = 0x4, fixed_abs, tag = 'smem constant byte address 0x4 - core index']
  #allocation1 [shape = 'u32[144,128]{1,0:T(1,128)}', space=vmem, size = 0x12000, scoped, tag = 'internal scratch']
  %s0 = inlined_call_operand.vmem [shape: bf16[2,800,80], index: 0, kind: input, shape index: {}]
  %s1 = inlined_call_operand.vmem [shape: bf16[80,128], index: 1, kind: input, shape index: {}]
  %s2 = inlined_call_operand.vmem [shape: f32[1,128], index: 2, kind: input, shape index: {}]
  %s3 = inlined_call_operand.vmem [shape: bf16[2,200,128], index: 3, kind: output, shape index: {}]
  %s4 = sld [smem:[#allocation0]]
  $region45: #{net_cifar10_forward.3} parent=0
    _
  %s6 = ssub.s32 1, %s4
  %s7 = scalar_select 0, %s6, %s4
  loop: start=0, step=1, limit=4
  $region2: #{net_cifar10_forward.3} parent=0 // loop_pre_header
    _
  $region3: #{net_cifar10_forward.3} parent=0 // loop_header
    %s9 = sphi 0, %s13
    %p10 = scmp.ge.s32.totalorder %s9, 4
    %s19 = sphi 0, %s21
    %s22 = sphi 0, %s19
    %s23 = sphi 0, %s22
    %s39 = sphi 0, %s23
    %s43 = sphi 0, %s43
    %s45 = sphi 0, %s43
    %s46 = sphi 0, %s45
    %s60 = sphi 0, %s46
    %s64 = sphi 0, %s64
    %s66 = sphi 0, %s64
    %s67 = sphi 0, %s66
    %s81 = sphi 0, %s67
    %s87 = sphi 0, %s89
    %s90 = sphi 0, %s87
    %s91 = sphi 0, %s90
    %s107 = sphi 0, %s91
  $region4: #{net_cifar10_forward.3} parent=0 // loop_header_branch
    %12 = sbr.rel (%p10) target = $region8
  $region5: #{net_cifar10_forward.3} parent=0 // loop_body
    %s14 = ssub.s32 %s9, 1
    %s15 = ssub.s32 %s9, 2
    %s16 = sadd.s32 %s9, 1
    %s17 = ssub.s32 %s9, %s16
    %p18 = scmp.eq.s32.totalorder %s17, 0
    %s20 = sadd.s32 %s19, 1
    %s21 = scalar_select %p18, %s19, %s20
    %p24 = pneg %p18
    %p25 = scmp.eq.s32.totalorder %s9, 1
    %p26 = por %p24, %p25
    %p27 = scmp.ne.s32.totalorder %s19, %s22
    %p28 = scmp.eq.s32.totalorder %s9, 0
    %p29 = por %p27, %p28
    %p30 = scmp.ne.s32.totalorder %s19, %s22
    %p31 = scmp.eq.s32.totalorder %s14, 1
    %p32 = por %p30, %p31
    %p33 = scmp.ne.s32.totalorder %s22, %s23
    %p34 = scmp.eq.s32.totalorder %s14, 0
    %p35 = por %p33, %p34
    %p36 = scmp.ne.s32.totalorder %s22, %s23
    %p37 = scmp.eq.s32.totalorder %s15, 1
    %p38 = por %p36, %p37
    %p40 = scmp.ne.s32.totalorder %s23, %s39
    %p41 = scmp.eq.s32.totalorder %s15, 0
    %p42 = por %p40, %p41
    %s44 = sadd.s32 %s43, 1
    %p47 = scmp.eq.s32.totalorder %s9, 1
    %p48 = scmp.ne.s32.totalorder %s43, %s45
    %p49 = scmp.eq.s32.totalorder %s9, 0
    %p50 = por %p48, %p49
    %p51 = scmp.ne.s32.totalorder %s43, %s45
    %p52 = scmp.eq.s32.totalorder %s14, 1
    %p53 = por %p51, %p52
    %p54 = scmp.ne.s32.totalorder %s45, %s46
    %p55 = scmp.eq.s32.totalorder %s14, 0
    %p56 = por %p54, %p55
    %p57 = scmp.ne.s32.totalorder %s45, %s46
    %p58 = scmp.eq.s32.totalorder %s15, 1
    %p59 = por %p57, %p58
    %p61 = scmp.ne.s32.totalorder %s46, %s60
    %p62 = scmp.eq.s32.totalorder %s15, 0
    %p63 = por %p61, %p62
    %s65 = sadd.s32 %s64, 1
    %p68 = scmp.eq.s32.totalorder %s9, 1
    %p69 = scmp.ne.s32.totalorder %s64, %s66
    %p70 = scmp.eq.s32.totalorder %s9, 0
    %p71 = por %p69, %p70
    %p72 = scmp.ne.s32.totalorder %s64, %s66
    %p73 = scmp.eq.s32.totalorder %s14, 1
    %p74 = por %p72, %p73
    %p75 = scmp.ne.s32.totalorder %s66, %s67
    %p76 = scmp.eq.s32.totalorder %s14, 0
    %p77 = por %p75, %p76
    %p78 = scmp.ne.s32.totalorder %s66, %s67
    %p79 = scmp.eq.s32.totalorder %s15, 1
    %p80 = por %p78, %p79
    %p82 = scmp.ne.s32.totalorder %s67, %s81
    %p83 = scmp.eq.s32.totalorder %s15, 0
    %p84 = por %p82, %p83
    %s85 = ssub.s32 %s9, %s16
    %p86 = scmp.eq.s32.totalorder %s85, 0
    %s88 = sadd.s32 %s87, 1
    %s89 = scalar_select %p86, %s87, %s88
    %p92 = pneg %p86
    %p93 = scmp.eq.s32.totalorder %s9, 1
    %p94 = por %p92, %p93
    %p95 = scmp.ne.s32.totalorder %s87, %s90
    %p96 = scmp.eq.s32.totalorder %s9, 0
    %p97 = por %p95, %p96
    %p98 = scmp.ne.s32.totalorder %s87, %s90
    %p99 = scmp.eq.s32.totalorder %s14, 1
    %p100 = por %p98, %p99
    %p101 = scmp.ne.s32.totalorder %s90, %s91
    %p102 = scmp.eq.s32.totalorder %s14, 0
    %p103 = por %p101, %p102
    %p104 = scmp.ne.s32.totalorder %s90, %s91
    %p105 = scmp.eq.s32.totalorder %s15, 1
    %p106 = por %p104, %p105
    %p108 = scmp.ne.s32.totalorder %s91, %s107
    %p109 = scmp.eq.s32.totalorder %s15, 0
    %p110 = por %p108, %p109
    %p111 = scmp.le.s32.totalorder 1, %s9
    %p112 = scmp.lt.s32.totalorder %s9, 3
    %p113 = pnand %p111, %p112
    %p114 = pneg %p113
    // Predicated region
    $region9: #{net_cifar10_forward.3} parent=5 // pred_check
      _
    $region10: #{net_cifar10_forward.3} parent=5 // pred_check_branch
      %116 = sbr.rel (%p113) target = $region12
    $region11: #{net_cifar10_forward.3} parent=5 // pred_region
      %s117 = ssub.s32 %s9, 1
      // Predicated region
      $region13: #{net_cifar10_forward.3} parent=11 // pred_check
        %p118 = pneg %p56
      $region14: #{net_cifar10_forward.3} parent=11 // pred_check_branch
        %120 = sbr.rel (%p118) target = $region16
      $region15: #{net_cifar10_forward.3} parent=11 // pred_region
        _
      $region16: #{net_cifar10_forward.3} parent=11 // pred_fallthru
        _
      // Predicated region
      $region17: #{net_cifar10_forward.3} parent=11 // pred_check
        %p121 = pneg %p77
      $region18: #{net_cifar10_forward.3} parent=11 // pred_check_branch
        %123 = sbr.rel (%p121) target = $region20
      $region19: #{net_cifar10_forward.3} parent=11 // pred_region
        _
      $region20: #{net_cifar10_forward.3} parent=11 // pred_fallthru
        _
    $region12: #{net_cifar10_forward.3} parent=5 // pred_fallthru
      _
    %p124 = scmp.lt.s32.totalorder %s9, 2
    // Predicated region
    $region21: #{net_cifar10_forward.3} parent=5 // pred_check
      %p125 = pneg %p124
    $region22: #{net_cifar10_forward.3} parent=5 // pred_check_branch
      %127 = sbr.rel (%p125) target = $region24
    $region23: #{net_cifar10_forward.3} parent=5 // pred_region
      // Predicated region
      $region25: #{net_cifar10_forward.3} parent=23 // pred_check
        %p128 = pneg %p29
      $region26: #{net_cifar10_forward.3} parent=23 // pred_check_branch
        %130 = sbr.rel (%p128) target = $region28
      $region27: #{net_cifar10_forward.3} parent=23 // pred_region
        %p131 = scmp.lt.s32.totalorder %s9, 1
        %s132 = scalar_select %p131, %s9, 1
        %s133 = smul.addr %s132, 100
        %s134 = smul.addr %s133, 4
        %s135 = scalar_lea.vmem %s0, %s134
      $region28: #{net_cifar10_forward.3} parent=23 // pred_fallthru
        _
    $region24: #{net_cifar10_forward.3} parent=5 // pred_fallthru
      _
    %p136 = scmp.le.s32.totalorder 1, %s9
    %p137 = scmp.lt.s32.totalorder %s9, 3
    %p138 = pnand %p136, %p137
    %p139 = pneg %p138
    // Predicated region
    $region29: #{net_cifar10_forward.3} parent=5 // pred_check
      _
    $region30: #{net_cifar10_forward.3} parent=5 // pred_check_branch
      %141 = sbr.rel (%p138) target = $region32
    $region31: #{net_cifar10_forward.3} parent=5 // pred_region
      %s142 = ssub.s32 %s9, 1
      %p143 = scmp.lt.s32.totalorder %s14, 1
      %s144 = scalar_select %p143, %s14, 1
      %s145 = smul.addr %s144, 100
      %s146 = smul.addr %s145, 4
      %s147 = scalar_lea.vmem %s0, %s146
      %p148 = pneg %p35
      %p149 = pneg %p32
      %p150 = pneg %p56
      %p151 = pneg %p53
      %p152 = pneg %p77
      %p153 = pneg %p74
      %p154 = pneg %p103
      %p155 = pneg %p100
      %p156 = scmp.lt.s32.totalorder %s14, 1
      %s157 = scalar_select %p156, %s14, 1
      %s158 = smul.addr %s157, 25
      %s159 = smul.addr %s158, 4
      %s160 = scalar_lea.vmem %s3, %s159
      %p161 = scmp.lt.s32.totalorder %s14, 1
      %s162 = scalar_select %p161, %s14, 1
      %s163 = smul.addr %s162, 100
      %s164 = smul.addr %s163, 4
      %s165 = scalar_lea.vmem %s0, %s164
      %p166 = scmp.lt.s32.totalorder %s14, 1
      %s167 = scalar_select %p166, %s14, 1
      %s168 = smul.addr %s167, 25
      %s169 = smul.addr %s168, 4
      %s170 = scalar_lea.vmem %s3, %s169
      %v172 = vld [vmem:[%s165] sm:$0xf]
      %v173 = vld [vmem:[%s165 + $0x4] sm:$0xf]
      %v174 = vld [vmem:[%s165 + $0x8] sm:$0xf]
      %v175 = vld [vmem:[%s165 + $0xc] sm:$0xf]
      %v176 = vld [vmem:[%s165 + $0x10] sm:$0xf]
      %v177 = vld [vmem:[%s165 + $0x14] sm:$0xf]
      %v178 = vld [vmem:[%s165 + $0x18] sm:$0xf]
      %v179 = vld [vmem:[%s165 + $0x1c] sm:$0xf]
      %v180 = vld [vmem:[%s165 + $0x20] sm:$0xf]
      %v181 = vld [vmem:[%s165 + $0x24] sm:$0xf]
      %v182 = vld [vmem:[%s165 + $0x28] sm:$0xf]
      %v183 = vld [vmem:[%s165 + $0x2c] sm:$0xf]
      %v184 = vld [vmem:[%s165 + $0x30] sm:$0xf]
      %v185 = vld [vmem:[%s165 + $0x34] sm:$0xf]
      %v186 = vld [vmem:[%s165 + $0x38] sm:$0xf]
      %v187 = vld [vmem:[%s165 + $0x3c] sm:$0xf]
      %v188 = vld [vmem:[%s165 + $0x40] sm:$0xf]
      %v189 = vld [vmem:[%s165 + $0x44] sm:$0xf]
      %v190 = vld [vmem:[%s165 + $0x48] sm:$0xf]
      %v191 = vld [vmem:[%s165 + $0x4c] sm:$0xf]
      %v192 = vld [vmem:[%s165 + $0x50] sm:$0xf]
      %v193 = vld [vmem:[%s165 + $0x54] sm:$0xf]
      %v194 = vld [vmem:[%s165 + $0x58] sm:$0xf]
      %v195 = vld [vmem:[%s165 + $0x5c] sm:$0xf]
      %v196 = vld [vmem:[%s165 + $0x60] sm:$0xf]
      %v197 = vld [vmem:[%s165 + $0x64] sm:$0xf]
      %v198 = vld [vmem:[%s165 + $0x68] sm:$0xf]
      %v199 = vld [vmem:[%s165 + $0x6c] sm:$0xf]
      %v200 = vld [vmem:[%s165 + $0x70] sm:$0xf]
      %v201 = vld [vmem:[%s165 + $0x74] sm:$0xf]
      %v202 = vld [vmem:[%s165 + $0x78] sm:$0xf]
      %v203 = vld [vmem:[%s165 + $0x7c] sm:$0xf]
      %v204 = vld [vmem:[%s165 + $0x80] sm:$0xf]
      %v205 = vld [vmem:[%s165 + $0x84] sm:$0xf]
      %v206 = vld [vmem:[%s165 + $0x88] sm:$0xf]
      %v207 = vld [vmem:[%s165 + $0x8c] sm:$0xf]
      %v208 = vld [vmem:[%s165 + $0x90] sm:$0xf]
      %v209 = vld [vmem:[%s165 + $0x94] sm:$0xf]
      %v210 = vld [vmem:[%s165 + $0x98] sm:$0xf]
      %v211 = vld [vmem:[%s165 + $0x9c] sm:$0xf]
      %v212 = vld [vmem:[%s165 + $0xa0] sm:$0xf]
      %v213 = vld [vmem:[%s165 + $0xa4] sm:$0xf]
      %v214 = vld [vmem:[%s165 + $0xa8] sm:$0xf]
      %v215 = vld [vmem:[%s165 + $0xac] sm:$0xf]
      %v216 = vld [vmem:[%s165 + $0xb0] sm:$0xf]
      %v217 = vld [vmem:[%s165 + $0xb4] sm:$0xf]
      %v218 = vld [vmem:[%s165 + $0xb8] sm:$0xf]
      %v219 = vld [vmem:[%s165 + $0xbc] sm:$0xf]
      %v220 = vld [vmem:[%s165 + $0xc0] sm:$0xf]
      %v221 = vld [vmem:[%s165 + $0xc4] sm:$0xf]
      %v222 = vld [vmem:[%s165 + $0xc8] sm:$0xf]
      %v223 = vld [vmem:[%s165 + $0xcc] sm:$0xf]
      %v224 = vld [vmem:[%s165 + $0xd0] sm:$0xf]
      %v225 = vld [vmem:[%s165 + $0xd4] sm:$0xf]
      %v226 = vld [vmem:[%s165 + $0xd8] sm:$0xf]
      %v227 = vld [vmem:[%s165 + $0xdc] sm:$0xf]
      %v228 = vld [vmem:[%s165 + $0xe0] sm:$0xf]
      %v229 = vld [vmem:[%s165 + $0xe4] sm:$0xf]
      %v230 = vld [vmem:[%s165 + $0xe8] sm:$0xf]
      %v231 = vld [vmem:[%s165 + $0xec] sm:$0xf]
      %v232 = vld [vmem:[%s165 + $0xf0] sm:$0xf]
      %v233 = vld [vmem:[%s165 + $0xf4] sm:$0xf]
      %v234 = vld [vmem:[%s165 + $0xf8] sm:$0xf]
      %v235 = vld [vmem:[%s165 + $0xfc] sm:$0xf]
      %v236 = vld [vmem:[%s165 + $0x100] sm:$0xf]
      %v237 = vld [vmem:[%s165 + $0x104] sm:$0xf]
      %v238 = vld [vmem:[%s165 + $0x108] sm:$0xf]
      %v239 = vld [vmem:[%s165 + $0x10c] sm:$0xf]
      %v240 = vld [vmem:[%s165 + $0x110] sm:$0xf]
      %v241 = vld [vmem:[%s165 + $0x114] sm:$0xf]
      %v242 = vld [vmem:[%s165 + $0x118] sm:$0xf]
      %v243 = vld [vmem:[%s165 + $0x11c] sm:$0xf]
      %v244 = vld [vmem:[%s165 + $0x120] sm:$0xf]
      %v245 = vld [vmem:[%s165 + $0x124] sm:$0xf]
      %v246 = vld [vmem:[%s165 + $0x128] sm:$0xf]
      %v247 = vld [vmem:[%s165 + $0x12c] sm:$0xf]
      %v248 = vld [vmem:[%s165 + $0x130] sm:$0xf]
      %v249 = vld [vmem:[%s165 + $0x134] sm:$0xf]
      %v250 = vld [vmem:[%s165 + $0x138] sm:$0xf]
      %v251 = vld [vmem:[%s165 + $0x13c] sm:$0xf]
      %v252 = vld [vmem:[%s165 + $0x140] sm:$0xf]
      %v253 = vld [vmem:[%s165 + $0x144] sm:$0xf]
      %v254 = vld [vmem:[%s165 + $0x148] sm:$0xf]
      %v255 = vld [vmem:[%s165 + $0x14c] sm:$0xf]
      %v256 = vld [vmem:[%s165 + $0x150] sm:$0xf]
      %v257 = vld [vmem:[%s165 + $0x154] sm:$0xf]
      %v258 = vld [vmem:[%s165 + $0x158] sm:$0xf]
      %v259 = vld [vmem:[%s165 + $0x15c] sm:$0xf]
      %v260 = vld [vmem:[%s165 + $0x160] sm:$0xf]
      %v261 = vld [vmem:[%s165 + $0x164] sm:$0xf]
      %v262 = vld [vmem:[%s165 + $0x168] sm:$0xf]
      %v263 = vld [vmem:[%s165 + $0x16c] sm:$0xf]
      %v264 = vld [vmem:[%s165 + $0x170] sm:$0xf]
      %v265 = vld [vmem:[%s165 + $0x174] sm:$0xf]
      %v266 = vld [vmem:[%s165 + $0x178] sm:$0xf]
      %v267 = vld [vmem:[%s165 + $0x17c] sm:$0xf]
      %v268 = vld [vmem:[%s165 + $0x180] sm:$0xf]
      %v269 = vld [vmem:[%s165 + $0x184] sm:$0xf]
      %v270 = vld [vmem:[%s165 + $0x188] sm:$0xf]
      %v271 = vld [vmem:[%s165 + $0x18c] sm:$0xf]
      %v272 = vld [vmem:[%s1] sm:$0xf]
      %v273 = vld [vmem:[%s1 + $0x4] sm:$0xf]
      %v274 = vld [vmem:[%s1 + $0x8] sm:$0xf]
      %v275 = vld [vmem:[%s1 + $0xc] sm:$0xf]
      %v276 = vld [vmem:[%s1 + $0x10] sm:$0xf]
      %v277 = vld [vmem:[%s1 + $0x14] sm:$0xf]
      %v278 = vld [vmem:[%s1 + $0x18] sm:$0xf]
      %v279 = vld [vmem:[%s1 + $0x1c] sm:$0xf]
      %v280 = vld [vmem:[%s1 + $0x20] sm:$0xf]
      %v281 = vld [vmem:[%s1 + $0x24] sm:$0xf]
      %v382 = vunpack.c.l.b16 %v172
      %v383 = vunpack.c.l.b16 %v173
      %v384 = vunpack.c.l.b16 %v174
      %v385 = vunpack.c.l.b16 %v175
      %v386 = vunpack.c.l.b16 %v176
      %v387 = vunpack.c.l.b16 %v177
      %v388 = vunpack.c.l.b16 %v178
      %v389 = vunpack.c.l.b16 %v179
      %v390 = vunpack.c.l.b16 %v180
      %v391 = vunpack.c.l.b16 %v181
      %v392 = vunpack.c.l.b16 %v182
      %v393 = vunpack.c.l.b16 %v183
      %v394 = vunpack.c.l.b16 %v184
      %v395 = vunpack.c.l.b16 %v185
      %v396 = vunpack.c.l.b16 %v186
      %v397 = vunpack.c.l.b16 %v187
      %v398 = vunpack.c.l.b16 %v188
      %v399 = vunpack.c.l.b16 %v189
      %v400 = vunpack.c.l.b16 %v190
      %v401 = vunpack.c.l.b16 %v191
      %v402 = vunpack.c.l.b16 %v192
      %v403 = vunpack.c.l.b16 %v193
      %v404 = vunpack.c.l.b16 %v194
      %v405 = vunpack.c.l.b16 %v195
      %v406 = vunpack.c.l.b16 %v196
      %v407 = vunpack.c.l.b16 %v197
      %v408 = vunpack.c.l.b16 %v198
      %v409 = vunpack.c.l.b16 %v199
      %v410 = vunpack.c.l.b16 %v200
      %v411 = vunpack.c.l.b16 %v201
      %v412 = vunpack.c.l.b16 %v202
      %v413 = vunpack.c.l.b16 %v203
      %v414 = vunpack.c.l.b16 %v204
      %v415 = vunpack.c.l.b16 %v205
      %v416 = vunpack.c.l.b16 %v206
      %v417 = vunpack.c.l.b16 %v207
      %v418 = vunpack.c.l.b16 %v208
      %v419 = vunpack.c.l.b16 %v209
      %v420 = vunpack.c.l.b16 %v210
      %v421 = vunpack.c.l.b16 %v211
      %v422 = vunpack.c.l.b16 %v212
      %v423 = vunpack.c.l.b16 %v213
      %v424 = vunpack.c.l.b16 %v214
      %v425 = vunpack.c.l.b16 %v215
      %v426 = vunpack.c.l.b16 %v216
      %v427 = vunpack.c.l.b16 %v217
      %v428 = vunpack.c.l.b16 %v218
      %v429 = vunpack.c.l.b16 %v219
      %v430 = vunpack.c.l.b16 %v220
      %v431 = vunpack.c.l.b16 %v221
      %v432 = vunpack.c.l.b16 %v222
      %v433 = vunpack.c.l.b16 %v223
      %v434 = vunpack.c.l.b16 %v224
      %v435 = vunpack.c.l.b16 %v225
      %v436 = vunpack.c.l.b16 %v226
      %v437 = vunpack.c.l.b16 %v227
      %v438 = vunpack.c.l.b16 %v228
      %v439 = vunpack.c.l.b16 %v229
      %v440 = vunpack.c.l.b16 %v230
      %v441 = vunpack.c.l.b16 %v231
      %v442 = vunpack.c.l.b16 %v232
      %v443 = vunpack.c.l.b16 %v233
      %v444 = vunpack.c.l.b16 %v234
      %v445 = vunpack.c.l.b16 %v235
      %v446 = vunpack.c.l.b16 %v236
      %v447 = vunpack.c.l.b16 %v237
      %v448 = vunpack.c.l.b16 %v238
      %v449 = vunpack.c.l.b16 %v239
      %v450 = vunpack.c.l.b16 %v240
      %v451 = vunpack.c.l.b16 %v241
      %v452 = vunpack.c.l.b16 %v242
      %v453 = vunpack.c.l.b16 %v243
      %v454 = vunpack.c.l.b16 %v244
      %v455 = vunpack.c.l.b16 %v245
      %v456 = vunpack.c.l.b16 %v246
      %v457 = vunpack.c.l.b16 %v247
      %v458 = vunpack.c.l.b16 %v248
      %v459 = vunpack.c.l.b16 %v249
      %v460 = vunpack.c.l.b16 %v250
      %v461 = vunpack.c.l.b16 %v251
      %v462 = vunpack.c.l.b16 %v252
      %v463 = vunpack.c.l.b16 %v253
      %v464 = vunpack.c.l.b16 %v254
      %v465 = vunpack.c.l.b16 %v255
      %v466 = vunpack.c.l.b16 %v256
      %v467 = vunpack.c.l.b16 %v257
      %v468 = vunpack.c.l.b16 %v258
      %v469 = vunpack.c.l.b16 %v259
      %v470 = vunpack.c.l.b16 %v260
      %v471 = vunpack.c.l.b16 %v261
      %v472 = vunpack.c.l.b16 %v262
      %v473 = vunpack.c.l.b16 %v263
      %v474 = vunpack.c.l.b16 %v264
      %v475 = vunpack.c.l.b16 %v265
      %v476 = vunpack.c.l.b16 %v266
      %v477 = vunpack.c.l.b16 %v267
      %v478 = vunpack.c.l.b16 %v268
      %v479 = vunpack.c.l.b16 %v269
      %v480 = vunpack.c.l.b16 %v270
      %v481 = vunpack.c.l.b16 %v271
      %v482 = vpack.c.b16 %v383, %v382
      %v483 = vpack.c.b16 %v385, %v384
      %v484 = vpack.c.b16 %v387, %v386
      %v485 = vpack.c.b16 %v389, %v388
      %v486 = vpack.c.b16 %v391, %v390
      %v487 = vpack.c.b16 %v393, %v392
      %v488 = vpack.c.b16 %v395, %v394
      %v489 = vpack.c.b16 %v397, %v396
      %v490 = vpack.c.b16 %v399, %v398
      %v491 = vpack.c.b16 %v401, %v400
      %v492 = vpack.c.b16 %v403, %v402
      %v493 = vpack.c.b16 %v405, %v404
      %v494 = vpack.c.b16 %v407, %v406
      %v495 = vpack.c.b16 %v409, %v408
      %v496 = vpack.c.b16 %v411, %v410
      %v497 = vpack.c.b16 %v413, %v412
      %v498 = vpack.c.b16 %v415, %v414
      %v499 = vpack.c.b16 %v417, %v416
      %v500 = vpack.c.b16 %v419, %v418
      %v501 = vpack.c.b16 %v421, %v420
      %v502 = vpack.c.b16 %v423, %v422
      %v503 = vpack.c.b16 %v425, %v424
      %v504 = vpack.c.b16 %v427, %v426
      %v505 = vpack.c.b16 %v429, %v428
      %v506 = vpack.c.b16 %v431, %v430
      %v507 = vpack.c.b16 %v433, %v432
      %v508 = vpack.c.b16 %v435, %v434
      %v509 = vpack.c.b16 %v437, %v436
      %v510 = vpack.c.b16 %v439, %v438
      %v511 = vpack.c.b16 %v441, %v440
      %v512 = vpack.c.b16 %v443, %v442
      %v513 = vpack.c.b16 %v445, %v444
      %v514 = vpack.c.b16 %v447, %v446
      %v515 = vpack.c.b16 %v449, %v448
      %v516 = vpack.c.b16 %v451, %v450
      %v517 = vpack.c.b16 %v453, %v452
      %v518 = vpack.c.b16 %v455, %v454
      %v519 = vpack.c.b16 %v457, %v456
      %v520 = vpack.c.b16 %v459, %v458
      %v521 = vpack.c.b16 %v461, %v460
      %v522 = vpack.c.b16 %v463, %v462
      %v523 = vpack.c.b16 %v465, %v464
      %v524 = vpack.c.b16 %v467, %v466
      %v525 = vpack.c.b16 %v469, %v468
      %v526 = vpack.c.b16 %v471, %v470
      %v527 = vpack.c.b16 %v473, %v472
      %v528 = vpack.c.b16 %v475, %v474
      %v529 = vpack.c.b16 %v477, %v476
      %v530 = vpack.c.b16 %v479, %v478
      %v531 = vpack.c.b16 %v481, %v480
      %v542 = vunpack.c.l.b16 %v272
      %v543 = vunpack.c.l.b16 %v273
      %v544 = vunpack.c.l.b16 %v274
      %v545 = vunpack.c.l.b16 %v275
      %v546 = vunpack.c.l.b16 %v276
      %v547 = vunpack.c.l.b16 %v277
      %v548 = vunpack.c.l.b16 %v278
      %v549 = vunpack.c.l.b16 %v279
      %v550 = vunpack.c.l.b16 %v280
      %v551 = vunpack.c.l.b16 %v281
      %v552 = vpack.c.b16 %v543, %v542
      %v553 = vpack.c.b16 %v545, %v544
      %v554 = vpack.c.b16 %v547, %v546
      %v555 = vpack.c.b16 %v549, %v548
      %v556 = vpack.c.b16 %v551, %v550
      %vm562 = vcmask 654336
      %v564 = vsel %vm562, %v482, 0
      %v567 = vsel %vm562, %v483, 0
      %v570 = vsel %vm562, %v484, 0
      %v573 = vsel %vm562, %v485, 0
      %v576 = vsel %vm562, %v486, 0
      %v579 = vsel %vm562, %v487, 0
      %v582 = vsel %vm562, %v488, 0
      %v585 = vsel %vm562, %v489, 0
      %v588 = vsel %vm562, %v490, 0
      %v591 = vsel %vm562, %v491, 0
      %v594 = vsel %vm562, %v492, 0
      %v597 = vsel %vm562, %v493, 0
      %v600 = vsel %vm562, %v494, 0
      %v603 = vsel %vm562, %v495, 0
      %v606 = vsel %vm562, %v496, 0
      %v609 = vsel %vm562, %v497, 0
      %v612 = vsel %vm562, %v498, 0
      %v615 = vsel %vm562, %v499, 0
      %v618 = vsel %vm562, %v500, 0
      %v621 = vsel %vm562, %v501, 0
      %v624 = vsel %vm562, %v502, 0
      %v627 = vsel %vm562, %v503, 0
      %v630 = vsel %vm562, %v504, 0
      %v633 = vsel %vm562, %v505, 0
      %v636 = vsel %vm562, %v506, 0
      %v639 = vsel %vm562, %v507, 0
      %v642 = vsel %vm562, %v508, 0
      %v645 = vsel %vm562, %v509, 0
      %v648 = vsel %vm562, %v510, 0
      %v651 = vsel %vm562, %v511, 0
      %v654 = vsel %vm562, %v512, 0
      %v657 = vsel %vm562, %v513, 0
      %v660 = vsel %vm562, %v514, 0
      %v663 = vsel %vm562, %v515, 0
      %v666 = vsel %vm562, %v516, 0
      %v669 = vsel %vm562, %v517, 0
      %v672 = vsel %vm562, %v518, 0
      %v675 = vsel %vm562, %v519, 0
      %v678 = vsel %vm562, %v520, 0
      %v681 = vsel %vm562, %v521, 0
      %v684 = vsel %vm562, %v522, 0
      %v687 = vsel %vm562, %v523, 0
      %v690 = vsel %vm562, %v524, 0
      %v693 = vsel %vm562, %v525, 0
      %v696 = vsel %vm562, %v526, 0
      %v699 = vsel %vm562, %v527, 0
      %v702 = vsel %vm562, %v528, 0
      %v705 = vsel %vm562, %v529, 0
      %v708 = vsel %vm562, %v530, 0
      %v711 = vsel %vm562, %v531, 0
      %713 = vmatprep.subr.bf16.mxu0 0
      %714 = vmatpush1.bf16.msra.mxu0 %v552
      %715 = vmatprep.subr.bf16.mxu0 0
      %716 = vmatpush1.bf16.msra.mxu0 %v553
      %717 = vmatprep.subr.bf16.mxu0 0
      %718 = vmatpush1.bf16.msra.mxu0 %v554
      %719 = vmatprep.subr.bf16.mxu0 0
      %720 = vmatpush1.bf16.msra.mxu0 %v555
      %721 = vmatprep.subr.bf16.mxu0 0
      %722 = vmatpush1.bf16.msra.mxu0 %v556
      %723 = vmatprep.subr.bf16.mxu0 0
      %724 = vmatpush1.bf16.msra.mxu0 0
      %725 = vmatprep.subr.bf16.mxu0 0
      %726 = vmatpush1.bf16.msra.mxu0 0
      %727 = vmatprep.subr.bf16.mxu0 0
      %728 = vmatpush1.bf16.msra.mxu0 0
      %729 = vmatprep.subr.bf16.mxu0 0
      %730 = vmatpush1.bf16.msra.mxu0 0
      %731 = vmatprep.subr.bf16.mxu0 0
      %732 = vmatpush1.bf16.msra.mxu0 0
      %733 = vmatprep.subr.bf16.mxu0 0
      %734 = vmatpush1.bf16.msra.mxu0 0
      %735 = vmatprep.subr.bf16.mxu0 0
      %736 = vmatpush1.bf16.msra.mxu0 0
      %737 = vmatprep.subr.bf16.mxu0 0
      %738 = vmatpush1.bf16.msra.mxu0 0
      %739 = vmatprep.subr.bf16.mxu0 0
      %740 = vmatpush1.bf16.msra.mxu0 0
      %741 = vmatprep.subr.bf16.mxu0 0
      %742 = vmatpush1.bf16.msra.mxu0 0
      %743 = vmatprep.subr.bf16.mxu0 0
      %744 = vmatpush1.bf16.msra.mxu0 0
      %745 = vmatprep.mubr.bf16.mxu0 0
      %746 = vmatmul.mubr.bf16.gmra.mrb[0].mxu0 %v564
      %v747 = vpop.f32.mrb[0].mxu0
      %v748 = vadd.f32 0.0, %v747
      %v749 = vpop.f32.mrb[0].mxu0
      %v750 = vpop.f32.mrb[0].mxu0
      %v751 = vadd.f32 0.0, %v750
      %v752 = vpop.f32.mrb[0].mxu0
      %753 = vmatprep.mubr.bf16.mxu0 0
      %754 = vmatmul.mubr.bf16.gmra.mrb[0].mxu0 %v567
      %v755 = vpop.f32.mrb[0].mxu0
      %v756 = vadd.f32 0.0, %v755
      %v757 = vpop.f32.mrb[0].mxu0
      %v758 = vpop.f32.mrb[0].mxu0
      %v759 = vadd.f32 0.0, %v758
      %v760 = vpop.f32.mrb[0].mxu0
      %761 = vmatprep.mubr.bf16.mxu0 0
      %762 = vmatmul.mubr.bf16.gmra.mrb[0].mxu0 %v570
      %v763 = vpop.f32.mrb[0].mxu0
      %v764 = vadd.f32 0.0, %v763
      %v765 = vpop.f32.mrb[0].mxu0
      %v766 = vpop.f32.mrb[0].mxu0
      %v767 = vadd.f32 0.0, %v766
      %v768 = vpop.f32.mrb[0].mxu0
      %769 = vmatprep.mubr.bf16.mxu0 0
      %770 = vmatmul.mubr.bf16.gmra.mrb[0].mxu0 %v573
      %v771 = vpop.f32.mrb[0].mxu0
      %v772 = vadd.f32 0.0, %v771
      %v773 = vpop.f32.mrb[0].mxu0
      %v774 = vpop.f32.mrb[0].mxu0
      %v775 = vadd.f32 0.0, %v774
      %v776 = vpop.f32.mrb[0].mxu0
      %777 = vmatprep.mubr.bf16.mxu0 0
      %778 = vmatmul.mubr.bf16.gmra.mrb[0].mxu0 %v576
      %v779 = vpop.f32.mrb[0].mxu0
      %v780 = vadd.f32 0.0, %v779
      %v781 = vpop.f32.mrb[0].mxu0
      %v782 = vpop.f32.mrb[0].mxu0
      %v783 = vadd.f32 0.0, %v782
      %v784 = vpop.f32.mrb[0].mxu0
      %785 = vmatprep.mubr.bf16.mxu0 0
      %786 = vmatmul.mubr.bf16.gmra.mrb[0].mxu0 %v579
      %v787 = vpop.f32.mrb[0].mxu0
      %v788 = vadd.f32 0.0, %v787
      %v789 = vpop.f32.mrb[0].mxu0
      %v790 = vpop.f32.mrb[0].mxu0
      %v791 = vadd.f32 0.0, %v790
      %v792 = vpop.f32.mrb[0].mxu0
      %793 = vmatprep.mubr.bf16.mxu0 0
      %794 = vmatmul.mubr.bf16.gmra.mrb[0].mxu0 %v582
      %v795 = vpop.f32.mrb[0].mxu0
      %v796 = vadd.f32 0.0, %v795
      %v797 = vpop.f32.mrb[0].mxu0
      %v798 = vpop.f32.mrb[0].mxu0
      %v799 = vadd.f32 0.0, %v798
      %v800 = vpop.f32.mrb[0].mxu0
      %801 = vmatprep.mubr.bf16.mxu0 0
      %802 = vmatmul.mubr.bf16.gmra.mrb[0].mxu0 %v585
      %v803 = vpop.f32.mrb[0].mxu0
      %v804 = vadd.f32 0.0, %v803
      %v805 = vpop.f32.mrb[0].mxu0
      %v806 = vpop.f32.mrb[0].mxu0
      %v807 = vadd.f32 0.0, %v806
      %v808 = vpop.f32.mrb[0].mxu0
      %809 = vmatprep.mubr.bf16.mxu0 0
      %810 = vmatmul.mubr.bf16.gmra.mrb[0].mxu0 %v588
      %v811 = vpop.f32.mrb[0].mxu0
      %v812 = vadd.f32 0.0, %v811
      %v813 = vpop.f32.mrb[0].mxu0
      %v814 = vpop.f32.mrb[0].mxu0
      %v815 = vadd.f32 0.0, %v814
      %v816 = vpop.f32.mrb[0].mxu0
      %817 = vmatprep.mubr.bf16.mxu0 0
      %818 = vmatmul.mubr.bf16.gmra.mrb[0].mxu0 %v591
      %v819 = vpop.f32.mrb[0].mxu0
      %v820 = vadd.f32 0.0, %v819
      %v821 = vpop.f32.mrb[0].mxu0
      %v822 = vpop.f32.mrb[0].mxu0
      %v823 = vadd.f32 0.0, %v822
      %v824 = vpop.f32.mrb[0].mxu0
      %825 = vmatprep.mubr.bf16.mxu0 0
      %826 = vmatmul.mubr.bf16.gmra.mrb[0].mxu0 %v594
      %v827 = vpop.f32.mrb[0].mxu0
      %v828 = vadd.f32 0.0, %v827
      %v829 = vpop.f32.mrb[0].mxu0
      %v830 = vpop.f32.mrb[0].mxu0
      %v831 = vadd.f32 0.0, %v830
      %v832 = vpop.f32.mrb[0].mxu0
      %833 = vmatprep.mubr.bf16.mxu0 0
      %834 = vmatmul.mubr.bf16.gmra.mrb[0].mxu0 %v597
      %v835 = vpop.f32.mrb[0].mxu0
      %v836 = vadd.f32 0.0, %v835
      %v837 = vpop.f32.mrb[0].mxu0
      %v838 = vpop.f32.mrb[0].mxu0
      %v839 = vadd.f32 0.0, %v838
      %v840 = vpop.f32.mrb[0].mxu0
      %841 = vmatprep.mubr.bf16.mxu0 0
      %842 = vmatmul.mubr.bf16.gmra.mrb[0].mxu0 %v600
      %v843 = vpop.f32.mrb[0].mxu0
      %v844 = vadd.f32 0.0, %v843
      %v845 = vpop.f32.mrb[0].mxu0
      %v846 = vpop.f32.mrb[0].mxu0
      %v847 = vadd.f32 0.0, %v846
      %v848 = vpop.f32.mrb[0].mxu0
      %849 = vmatprep.mubr.bf16.mxu0 0
      %850 = vmatmul.mubr.bf16.gmra.mrb[0].mxu0 %v603
      %v851 = vpop.f32.mrb[0].mxu0
      %v852 = vadd.f32 0.0, %v851
      %v853 = vpop.f32.mrb[0].mxu0
      %v854 = vpop.f32.mrb[0].mxu0
      %v855 = vadd.f32 0.0, %v854
      %v856 = vpop.f32.mrb[0].mxu0
      %857 = vmatprep.mubr.bf16.mxu0 0
      %858 = vmatmul.mubr.bf16.gmra.mrb[0].mxu0 %v606
      %v859 = vpop.f32.mrb[0].mxu0
      %v860 = vadd.f32 0.0, %v859
      %v861 = vpop.f32.mrb[0].mxu0
      %v862 = vpop.f32.mrb[0].mxu0
      %v863 = vadd.f32 0.0, %v862
      %v864 = vpop.f32.mrb[0].mxu0
      %865 = vmatprep.mubr.bf16.mxu0 0
      %866 = vmatmul.mubr.bf16.gmra.mrb[0].mxu0 %v609
      %v867 = vpop.f32.mrb[0].mxu0
      %v868 = vadd.f32 0.0, %v867
      %v869 = vpop.f32.mrb[0].mxu0
      %v870 = vpop.f32.mrb[0].mxu0
      %v871 = vadd.f32 0.0, %v870
      %v872 = vpop.f32.mrb[0].mxu0
      %873 = vmatprep.mubr.bf16.mxu0 0
      %874 = vmatmul.mubr.bf16.gmra.mrb[0].mxu0 %v612
      %v875 = vpop.f32.mrb[0].mxu0
      %v876 = vadd.f32 0.0, %v875
      %v877 = vpop.f32.mrb[0].mxu0
      %v878 = vpop.f32.mrb[0].mxu0
      %v879 = vadd.f32 0.0, %v878
      %v880 = vpop.f32.mrb[0].mxu0
      %881 = vmatprep.mubr.bf16.mxu0 0
      %882 = vmatmul.mubr.bf16.gmra.mrb[0].mxu0 %v615
      %v883 = vpop.f32.mrb[0].mxu0
      %v884 = vadd.f32 0.0, %v883
      %v885 = vpop.f32.mrb[0].mxu0
      %v886 = vpop.f32.mrb[0].mxu0
      %v887 = vadd.f32 0.0, %v886
      %v888 = vpop.f32.mrb[0].mxu0
      %889 = vmatprep.mubr.bf16.mxu0 0
      %890 = vmatmul.mubr.bf16.gmra.mrb[0].mxu0 %v618
      %v891 = vpop.f32.mrb[0].mxu0
      %v892 = vadd.f32 0.0, %v891
      %v893 = vpop.f32.mrb[0].mxu0
      %v894 = vpop.f32.mrb[0].mxu0
      %v895 = vadd.f32 0.0, %v894
      %v896 = vpop.f32.mrb[0].mxu0
      %897 = vmatprep.mubr.bf16.mxu0 0
      %898 = vmatmul.mubr.bf16.gmra.mrb[0].mxu0 %v621
      %v899 = vpop.f32.mrb[0].mxu0
      %v900 = vadd.f32 0.0, %v899
      %v901 = vpop.f32.mrb[0].mxu0
      %v902 = vpop.f32.mrb[0].mxu0
      %v903 = vadd.f32 0.0, %v902
      %v904 = vpop.f32.mrb[0].mxu0
      %905 = vmatprep.mubr.bf16.mxu0 0
      %906 = vmatmul.mubr.bf16.gmra.mrb[0].mxu0 %v624
      %v907 = vpop.f32.mrb[0].mxu0
      %v908 = vadd.f32 0.0, %v907
      %v909 = vpop.f32.mrb[0].mxu0
      %v910 = vpop.f32.mrb[0].mxu0
      %v911 = vadd.f32 0.0, %v910
      %v912 = vpop.f32.mrb[0].mxu0
      %913 = vmatprep.mubr.bf16.mxu0 0
      %914 = vmatmul.mubr.bf16.gmra.mrb[0].mxu0 %v627
      %v915 = vpop.f32.mrb[0].mxu0
      %v916 = vadd.f32 0.0, %v915
      %v917 = vpop.f32.mrb[0].mxu0
      %v918 = vpop.f32.mrb[0].mxu0
      %v919 = vadd.f32 0.0, %v918
      %v920 = vpop.f32.mrb[0].mxu0
      %921 = vmatprep.mubr.bf16.mxu0 0
      %922 = vmatmul.mubr.bf16.gmra.mrb[0].mxu0 %v630
      %v923 = vpop.f32.mrb[0].mxu0
      %v924 = vadd.f32 0.0, %v923
      %v925 = vpop.f32.mrb[0].mxu0
      %v926 = vpop.f32.mrb[0].mxu0
      %v927 = vadd.f32 0.0, %v926
      %v928 = vpop.f32.mrb[0].mxu0
      %929 = vmatprep.mubr.bf16.mxu0 0
      %930 = vmatmul.mubr.bf16.gmra.mrb[0].mxu0 %v633
      %v931 = vpop.f32.mrb[0].mxu0
      %v932 = vadd.f32 0.0, %v931
      %v933 = vpop.f32.mrb[0].mxu0
      %v934 = vpop.f32.mrb[0].mxu0
      %v935 = vadd.f32 0.0, %v934
      %v936 = vpop.f32.mrb[0].mxu0
      %937 = vmatprep.mubr.bf16.mxu0 0
      %938 = vmatmul.mubr.bf16.gmra.mrb[0].mxu0 %v636
      %v939 = vpop.f32.mrb[0].mxu0
      %v940 = vadd.f32 0.0, %v939
      %v941 = vpop.f32.mrb[0].mxu0
      %v942 = vpop.f32.mrb[0].mxu0
      %v943 = vadd.f32 0.0, %v942
      %v944 = vpop.f32.mrb[0].mxu0
      %945 = vmatprep.mubr.bf16.mxu0 0
      %946 = vmatmul.mubr.bf16.gmra.mrb[0].mxu0 %v639
      %v947 = vpop.f32.mrb[0].mxu0
      %v948 = vadd.f32 0.0, %v947
      %v949 = vpop.f32.mrb[0].mxu0
      %v950 = vpop.f32.mrb[0].mxu0
      %v951 = vadd.f32 0.0, %v950
      %v952 = vpop.f32.mrb[0].mxu0
      %953 = vmatprep.mubr.bf16.mxu0 0
      %954 = vmatmul.mubr.bf16.gmra.mrb[0].mxu0 %v642
      %v955 = vpop.f32.mrb[0].mxu0
      %v956 = vadd.f32 0.0, %v955
      %v957 = vpop.f32.mrb[0].mxu0
      %v958 = vpop.f32.mrb[0].mxu0
      %v959 = vadd.f32 0.0, %v958
      %v960 = vpop.f32.mrb[0].mxu0
      %961 = vmatprep.mubr.bf16.mxu0 0
      %962 = vmatmul.mubr.bf16.gmra.mrb[0].mxu0 %v645
      %v963 = vpop.f32.mrb[0].mxu0
      %v964 = vadd.f32 0.0, %v963
      %v965 = vpop.f32.mrb[0].mxu0
      %v966 = vpop.f32.mrb[0].mxu0
      %v967 = vadd.f32 0.0, %v966
      %v968 = vpop.f32.mrb[0].mxu0
      %969 = vmatprep.mubr.bf16.mxu0 0
      %970 = vmatmul.mubr.bf16.gmra.mrb[0].mxu0 %v648
      %v971 = vpop.f32.mrb[0].mxu0
      %v972 = vadd.f32 0.0, %v971
      %v973 = vpop.f32.mrb[0].mxu0
      %v974 = vpop.f32.mrb[0].mxu0
      %v975 = vadd.f32 0.0, %v974
      %v976 = vpop.f32.mrb[0].mxu0
      %977 = vmatprep.mubr.bf16.mxu0 0
      %978 = vmatmul.mubr.bf16.gmra.mrb[0].mxu0 %v651
      %v979 = vpop.f32.mrb[0].mxu0
      %v980 = vadd.f32 0.0, %v979
      %v981 = vpop.f32.mrb[0].mxu0
      %v982 = vpop.f32.mrb[0].mxu0
      %v983 = vadd.f32 0.0, %v982
      %v984 = vpop.f32.mrb[0].mxu0
      %985 = vmatprep.mubr.bf16.mxu0 0
      %986 = vmatmul.mubr.bf16.gmra.mrb[0].mxu0 %v654
      %v987 = vpop.f32.mrb[0].mxu0
      %v988 = vadd.f32 0.0, %v987
      %v989 = vpop.f32.mrb[0].mxu0
      %v990 = vpop.f32.mrb[0].mxu0
      %v991 = vadd.f32 0.0, %v990
      %v992 = vpop.f32.mrb[0].mxu0
      %993 = vmatprep.mubr.bf16.mxu0 0
      %994 = vmatmul.mubr.bf16.gmra.mrb[0].mxu0 %v657
      %v995 = vpop.f32.mrb[0].mxu0
      %v996 = vadd.f32 0.0, %v995
      %v997 = vpop.f32.mrb[0].mxu0
      %v998 = vpop.f32.mrb[0].mxu0
      %v999 = vadd.f32 0.0, %v998
      %v1000 = vpop.f32.mrb[0].mxu0
      %1001 = vmatprep.mubr.bf16.mxu0 0
      %1002 = vmatmul.mubr.bf16.gmra.mrb[0].mxu0 %v660
      %v1003 = vpop.f32.mrb[0].mxu0
      %v1004 = vadd.f32 0.0, %v1003
      %v1005 = vpop.f32.mrb[0].mxu0
      %v1006 = vpop.f32.mrb[0].mxu0
      %v1007 = vadd.f32 0.0, %v1006
      %v1008 = vpop.f32.mrb[0].mxu0
      %1009 = vmatprep.mubr.bf16.mxu0 0
      %1010 = vmatmul.mubr.bf16.gmra.mrb[0].mxu0 %v663
      %v1011 = vpop.f32.mrb[0].mxu0
      %v1012 = vadd.f32 0.0, %v1011
      %v1013 = vpop.f32.mrb[0].mxu0
      %v1014 = vpop.f32.mrb[0].mxu0
      %v1015 = vadd.f32 0.0, %v1014
      %v1016 = vpop.f32.mrb[0].mxu0
      %1017 = vmatprep.mubr.bf16.mxu0 0
      %1018 = vmatmul.mubr.bf16.gmra.mrb[0].mxu0 %v666
      %v1019 = vpop.f32.mrb[0].mxu0
      %v1020 = vadd.f32 0.0, %v1019
      %v1021 = vpop.f32.mrb[0].mxu0
      %v1022 = vpop.f32.mrb[0].mxu0
      %v1023 = vadd.f32 0.0, %v1022
      %v1024 = vpop.f32.mrb[0].mxu0
      %1025 = vmatprep.mubr.bf16.mxu0 0
      %1026 = vmatmul.mubr.bf16.gmra.mrb[0].mxu0 %v669
      %v1027 = vpop.f32.mrb[0].mxu0
      %v1028 = vadd.f32 0.0, %v1027
      %v1029 = vpop.f32.mrb[0].mxu0
      %v1030 = vpop.f32.mrb[0].mxu0
      %v1031 = vadd.f32 0.0, %v1030
      %v1032 = vpop.f32.mrb[0].mxu0
      %1033 = vmatprep.mubr.bf16.mxu0 0
      %1034 = vmatmul.mubr.bf16.gmra.mrb[0].mxu0 %v672
      %v1035 = vpop.f32.mrb[0].mxu0
      %v1036 = vadd.f32 0.0, %v1035
      %v1037 = vpop.f32.mrb[0].mxu0
      %v1038 = vpop.f32.mrb[0].mxu0
      %v1039 = vadd.f32 0.0, %v1038
      %v1040 = vpop.f32.mrb[0].mxu0
      %1041 = vmatprep.mubr.bf16.mxu0 0
      %1042 = vmatmul.mubr.bf16.gmra.mrb[0].mxu0 %v675
      %v1043 = vpop.f32.mrb[0].mxu0
      %v1044 = vadd.f32 0.0, %v1043
      %v1045 = vpop.f32.mrb[0].mxu0
      %v1046 = vpop.f32.mrb[0].mxu0
      %v1047 = vadd.f32 0.0, %v1046
      %v1048 = vpop.f32.mrb[0].mxu0
      %1049 = vmatprep.mubr.bf16.mxu0 0
      %1050 = vmatmul.mubr.bf16.gmra.mrb[0].mxu0 %v678
      %v1051 = vpop.f32.mrb[0].mxu0
      %v1052 = vadd.f32 0.0, %v1051
      %v1053 = vpop.f32.mrb[0].mxu0
      %v1054 = vpop.f32.mrb[0].mxu0
      %v1055 = vadd.f32 0.0, %v1054
      %v1056 = vpop.f32.mrb[0].mxu0
      %1057 = vmatprep.mubr.bf16.mxu0 0
      %1058 = vmatmul.mubr.bf16.gmra.mrb[0].mxu0 %v681
      %v1059 = vpop.f32.mrb[0].mxu0
      %v1060 = vadd.f32 0.0, %v1059
      %v1061 = vpop.f32.mrb[0].mxu0
      %v1062 = vpop.f32.mrb[0].mxu0
      %v1063 = vadd.f32 0.0, %v1062
      %v1064 = vpop.f32.mrb[0].mxu0
      %1065 = vmatprep.mubr.bf16.mxu0 0
      %1066 = vmatmul.mubr.bf16.gmra.mrb[0].mxu0 %v684
      %v1067 = vpop.f32.mrb[0].mxu0
      %v1068 = vadd.f32 0.0, %v1067
      %v1069 = vpop.f32.mrb[0].mxu0
      %v1070 = vpop.f32.mrb[0].mxu0
      %v1071 = vadd.f32 0.0, %v1070
      %v1072 = vpop.f32.mrb[0].mxu0
      %1073 = vmatprep.mubr.bf16.mxu0 0
      %1074 = vmatmul.mubr.bf16.gmra.mrb[0].mxu0 %v687
      %v1075 = vpop.f32.mrb[0].mxu0
      %v1076 = vadd.f32 0.0, %v1075
      %v1077 = vpop.f32.mrb[0].mxu0
      %v1078 = vpop.f32.mrb[0].mxu0
      %v1079 = vadd.f32 0.0, %v1078
      %v1080 = vpop.f32.mrb[0].mxu0
      %1081 = vmatprep.mubr.bf16.mxu0 0
      %1082 = vmatmul.mubr.bf16.gmra.mrb[0].mxu0 %v690
      %v1083 = vpop.f32.mrb[0].mxu0
      %v1084 = vadd.f32 0.0, %v1083
      %v1085 = vpop.f32.mrb[0].mxu0
      %v1086 = vpop.f32.mrb[0].mxu0
      %v1087 = vadd.f32 0.0, %v1086
      %v1088 = vpop.f32.mrb[0].mxu0
      %1089 = vmatprep.mubr.bf16.mxu0 0
      %1090 = vmatmul.mubr.bf16.gmra.mrb[0].mxu0 %v693
      %v1091 = vpop.f32.mrb[0].mxu0
      %v1092 = vadd.f32 0.0, %v1091
      %v1093 = vpop.f32.mrb[0].mxu0
      %v1094 = vpop.f32.mrb[0].mxu0
      %v1095 = vadd.f32 0.0, %v1094
      %v1096 = vpop.f32.mrb[0].mxu0
      %1097 = vmatprep.mubr.bf16.mxu0 0
      %1098 = vmatmul.mubr.bf16.gmra.mrb[0].mxu0 %v696
      %v1099 = vpop.f32.mrb[0].mxu0
      %v1100 = vadd.f32 0.0, %v1099
      %v1101 = vpop.f32.mrb[0].mxu0
      %v1102 = vpop.f32.mrb[0].mxu0
      %v1103 = vadd.f32 0.0, %v1102
      %v1104 = vpop.f32.mrb[0].mxu0
      %1105 = vmatprep.mubr.bf16.mxu0 0
      %1106 = vmatmul.mubr.bf16.gmra.mrb[0].mxu0 %v699
      %v1107 = vpop.f32.mrb[0].mxu0
      %v1108 = vadd.f32 0.0, %v1107
      %v1109 = vpop.f32.mrb[0].mxu0
      %v1110 = vpop.f32.mrb[0].mxu0
      %v1111 = vadd.f32 0.0, %v1110
      %v1112 = vpop.f32.mrb[0].mxu0
      %1113 = vmatprep.mubr.bf16.mxu0 0
      %1114 = vmatmul.mubr.bf16.gmra.mrb[0].mxu0 %v702
      %v1115 = vpop.f32.mrb[0].mxu0
      %v1116 = vadd.f32 0.0, %v1115
      %v1117 = vpop.f32.mrb[0].mxu0
      %v1118 = vpop.f32.mrb[0].mxu0
      %v1119 = vadd.f32 0.0, %v1118
      %v1120 = vpop.f32.mrb[0].mxu0
      %1121 = vmatprep.mubr.bf16.mxu0 0
      %1122 = vmatmul.mubr.bf16.gmra.mrb[0].mxu0 %v705
      %v1123 = vpop.f32.mrb[0].mxu0
      %v1124 = vadd.f32 0.0, %v1123
      %v1125 = vpop.f32.mrb[0].mxu0
      %v1126 = vpop.f32.mrb[0].mxu0
      %v1127 = vadd.f32 0.0, %v1126
      %v1128 = vpop.f32.mrb[0].mxu0
      %1129 = vmatprep.mubr.bf16.mxu0 0
      %1130 = vmatmul.mubr.bf16.gmra.mrb[0].mxu0 %v708
      %v1131 = vpop.f32.mrb[0].mxu0
      %v1132 = vadd.f32 0.0, %v1131
      %v1133 = vpop.f32.mrb[0].mxu0
      %v1134 = vpop.f32.mrb[0].mxu0
      %v1135 = vadd.f32 0.0, %v1134
      %v1136 = vpop.f32.mrb[0].mxu0
      %1137 = vmatprep.mubr.bf16.mxu0 0
      %1138 = vmatmul.mubr.bf16.gmra.mrb[0].mxu0 %v711
      %v1139 = vpop.f32.mrb[0].mxu0
      %v1140 = vadd.f32 0.0, %v1139
      %v1141 = vpop.f32.mrb[0].mxu0
      %v1142 = vpop.f32.mrb[0].mxu0
      %v1143 = vadd.f32 0.0, %v1142
      %v1144 = vpop.f32.mrb[0].mxu0
      %1145 = vdwg.mxu0
      %v1146 = vmax.f32 %v748, %v847
      %v1147 = vmax.f32 %v751, %v852
      %v1148 = vmax.f32 %v756, %v855
      %v1149 = vmax.f32 %v759, %v860
      %v1150 = vmax.f32 %v764, %v863
      %v1151 = vmax.f32 %v767, %v868
      %v1152 = vmax.f32 %v772, %v871
      %v1153 = vmax.f32 %v775, %v876
      %v1154 = vmax.f32 %v780, %v879
      %v1155 = vmax.f32 %v783, %v884
      %v1156 = vmax.f32 %v788, %v887
      %v1157 = vmax.f32 %v791, %v892
      %v1158 = vmax.f32 %v796, %v895
      %v1159 = vmax.f32 %v799, %v900
      %v1160 = vmax.f32 %v804, %v903
      %v1161 = vmax.f32 %v807, %v908
      %v1162 = vmax.f32 %v812, %v911
      %v1163 = vmax.f32 %v815, %v916
      %v1164 = vmax.f32 %v820, %v919
      %v1165 = vmax.f32 %v823, %v924
      %v1166 = vmax.f32 %v828, %v927
      %v1167 = vmax.f32 %v831, %v932
      %v1168 = vmax.f32 %v836, %v935
      %v1169 = vmax.f32 %v839, %v940
      %v1170 = vmax.f32 %v844, %v943
      %v1171 = vmax.f32 %v948, %v1047
      %v1172 = vmax.f32 %v951, %v1052
      %v1173 = vmax.f32 %v956, %v1055
      %v1174 = vmax.f32 %v959, %v1060
      %v1175 = vmax.f32 %v964, %v1063
      %v1176 = vmax.f32 %v967, %v1068
      %v1177 = vmax.f32 %v972, %v1071
      %v1178 = vmax.f32 %v975, %v1076
      %v1179 = vmax.f32 %v980, %v1079
      %v1180 = vmax.f32 %v983, %v1084
      %v1181 = vmax.f32 %v988, %v1087
      %v1182 = vmax.f32 %v991, %v1092
      %v1183 = vmax.f32 %v996, %v1095
      %v1184 = vmax.f32 %v999, %v1100
      %v1185 = vmax.f32 %v1004, %v1103
      %v1186 = vmax.f32 %v1007, %v1108
      %v1187 = vmax.f32 %v1012, %v1111
      %v1188 = vmax.f32 %v1015, %v1116
      %v1189 = vmax.f32 %v1020, %v1119
      %v1190 = vmax.f32 %v1023, %v1124
      %v1191 = vmax.f32 %v1028, %v1127
      %v1192 = vmax.f32 %v1031, %v1132
      %v1193 = vmax.f32 %v1036, %v1135
      %v1194 = vmax.f32 %v1039, %v1140
      %v1195 = vmax.f32 %v1044, %v1143
      %v1196 = vmax.f32 %v1146, %v1171
      %v1197 = vmax.f32 %v1147, %v1172
      %v1198 = vmax.f32 %v1148, %v1173
      %v1199 = vmax.f32 %v1149, %v1174
      %v1200 = vmax.f32 %v1150, %v1175
      %v1201 = vmax.f32 %v1151, %v1176
      %v1202 = vmax.f32 %v1152, %v1177
      %v1203 = vmax.f32 %v1153, %v1178
      %v1204 = vmax.f32 %v1154, %v1179
      %v1205 = vmax.f32 %v1155, %v1180
      %v1206 = vmax.f32 %v1156, %v1181
      %v1207 = vmax.f32 %v1157, %v1182
      %v1208 = vmax.f32 %v1158, %v1183
      %v1209 = vmax.f32 %v1159, %v1184
      %v1210 = vmax.f32 %v1160, %v1185
      %v1211 = vmax.f32 %v1161, %v1186
      %v1212 = vmax.f32 %v1162, %v1187
      %v1213 = vmax.f32 %v1163, %v1188
      %v1214 = vmax.f32 %v1164, %v1189
      %v1215 = vmax.f32 %v1165, %v1190
      %v1216 = vmax.f32 %v1166, %v1191
      %v1217 = vmax.f32 %v1167, %v1192
      %v1218 = vmax.f32 %v1168, %v1193
      %v1219 = vmax.f32 %v1169, %v1194
      %v1220 = vmax.f32 %v1170, %v1195
      %v1221 = vld [vmem:[%s2] sm:$0x1]
      %v1223 = vlaneseq
      %v1224 = vshrl.u32 %v1223, 7
      %v1225 = vsub.s32 0, %v1224
      %v1226 = vrot.slane %v1221, %v1225
      %v1228 = vadd.f32 %v1196, %v1226
      %v1229 = vadd.f32 %v1197, %v1226
      %v1230 = vadd.f32 %v1198, %v1226
      %v1231 = vadd.f32 %v1199, %v1226
      %v1232 = vadd.f32 %v1200, %v1226
      %v1233 = vadd.f32 %v1201, %v1226
      %v1234 = vadd.f32 %v1202, %v1226
      %v1235 = vadd.f32 %v1203, %v1226
      %v1236 = vadd.f32 %v1204, %v1226
      %v1237 = vadd.f32 %v1205, %v1226
      %v1238 = vadd.f32 %v1206, %v1226
      %v1239 = vadd.f32 %v1207, %v1226
      %v1240 = vadd.f32 %v1208, %v1226
      %v1241 = vadd.f32 %v1209, %v1226
      %v1242 = vadd.f32 %v1210, %v1226
      %v1243 = vadd.f32 %v1211, %v1226
      %v1244 = vadd.f32 %v1212, %v1226
      %v1245 = vadd.f32 %v1213, %v1226
      %v1246 = vadd.f32 %v1214, %v1226
      %v1247 = vadd.f32 %v1215, %v1226
      %v1248 = vadd.f32 %v1216, %v1226
      %v1249 = vadd.f32 %v1217, %v1226
      %v1250 = vadd.f32 %v1218, %v1226
      %v1251 = vadd.f32 %v1219, %v1226
      %v1252 = vadd.f32 %v1220, %v1226
      %v1253 = vmax.f32 %v1228, 0.0
      %v1254 = vmax.f32 %v1229, 0.0
      %v1255 = vmax.f32 %v1230, 0.0
      %v1256 = vmax.f32 %v1231, 0.0
      %v1257 = vmax.f32 %v1232, 0.0
      %v1258 = vmax.f32 %v1233, 0.0
      %v1259 = vmax.f32 %v1234, 0.0
      %v1260 = vmax.f32 %v1235, 0.0
      %v1261 = vmax.f32 %v1236, 0.0
      %v1262 = vmax.f32 %v1237, 0.0
      %v1263 = vmax.f32 %v1238, 0.0
      %v1264 = vmax.f32 %v1239, 0.0
      %v1265 = vmax.f32 %v1240, 0.0
      %v1266 = vmax.f32 %v1241, 0.0
      %v1267 = vmax.f32 %v1242, 0.0
      %v1268 = vmax.f32 %v1243, 0.0
      %v1269 = vmax.f32 %v1244, 0.0
      %v1270 = vmax.f32 %v1245, 0.0
      %v1271 = vmax.f32 %v1246, 0.0
      %v1272 = vmax.f32 %v1247, 0.0
      %v1273 = vmax.f32 %v1248, 0.0
      %v1274 = vmax.f32 %v1249, 0.0
      %v1275 = vmax.f32 %v1250, 0.0
      %v1276 = vmax.f32 %v1251, 0.0
      %v1277 = vmax.f32 %v1252, 0.0
      %v1278 = vpack.c.bf16 %v1254, %v1253
      %v1279 = vpack.c.bf16 %v1256, %v1255
      %v1280 = vpack.c.bf16 %v1258, %v1257
      %v1281 = vpack.c.bf16 %v1260, %v1259
      %v1282 = vpack.c.bf16 %v1262, %v1261
      %v1283 = vpack.c.bf16 %v1264, %v1263
      %v1284 = vpack.c.bf16 %v1266, %v1265
      %v1285 = vpack.c.bf16 %v1268, %v1267
      %v1286 = vpack.c.bf16 %v1270, %v1269
      %v1287 = vpack.c.bf16 %v1272, %v1271
      %v1288 = vpack.c.bf16 %v1274, %v1273
      %v1289 = vpack.c.bf16 %v1276, %v1275
      %v1290 = vpack.c.bf16 %v1277, %v1277
      %v1304 = vunpack.c.l.b16 %v1278
      %v1305 = vunpack.c.h.b16 %v1278
      %v1306 = vunpack.c.l.b16 %v1279
      %v1307 = vunpack.c.h.b16 %v1279
      %v1308 = vunpack.c.l.b16 %v1280
      %v1309 = vunpack.c.h.b16 %v1280
      %v1310 = vunpack.c.l.b16 %v1281
      %v1311 = vunpack.c.h.b16 %v1281
      %v1312 = vunpack.c.l.b16 %v1282
      %v1313 = vunpack.c.h.b16 %v1282
      %v1314 = vunpack.c.l.b16 %v1283
      %v1315 = vunpack.c.h.b16 %v1283
      %v1316 = vunpack.c.l.b16 %v1284
      %v1317 = vunpack.c.h.b16 %v1284
      %v1318 = vunpack.c.l.b16 %v1285
      %v1319 = vunpack.c.h.b16 %v1285
      %v1320 = vunpack.c.l.b16 %v1286
      %v1321 = vunpack.c.h.b16 %v1286
      %v1322 = vunpack.c.l.b16 %v1287
      %v1323 = vunpack.c.h.b16 %v1287
      %v1324 = vunpack.c.l.b16 %v1288
      %v1325 = vunpack.c.h.b16 %v1288
      %v1326 = vunpack.c.l.b16 %v1289
      %v1327 = vunpack.c.h.b16 %v1289
      %v1328 = vunpack.c.l.b16 %v1290
      %v1329 = vpack.c.b16 %v1304, %v1304
      %v1330 = vpack.c.b16 %v1305, %v1305
      %v1331 = vpack.c.b16 %v1306, %v1306
      %v1332 = vpack.c.b16 %v1307, %v1307
      %v1333 = vpack.c.b16 %v1308, %v1308
      %v1334 = vpack.c.b16 %v1309, %v1309
      %v1335 = vpack.c.b16 %v1310, %v1310
      %v1336 = vpack.c.b16 %v1311, %v1311
      %v1337 = vpack.c.b16 %v1312, %v1312
      %v1338 = vpack.c.b16 %v1313, %v1313
      %v1339 = vpack.c.b16 %v1314, %v1314
      %v1340 = vpack.c.b16 %v1315, %v1315
      %v1341 = vpack.c.b16 %v1316, %v1316
      %v1342 = vpack.c.b16 %v1317, %v1317
      %v1343 = vpack.c.b16 %v1318, %v1318
      %v1344 = vpack.c.b16 %v1319, %v1319
      %v1345 = vpack.c.b16 %v1320, %v1320
      %v1346 = vpack.c.b16 %v1321, %v1321
      %v1347 = vpack.c.b16 %v1322, %v1322
      %v1348 = vpack.c.b16 %v1323, %v1323
      %v1349 = vpack.c.b16 %v1324, %v1324
      %v1350 = vpack.c.b16 %v1325, %v1325
      %v1351 = vpack.c.b16 %v1326, %v1326
      %v1352 = vpack.c.b16 %v1327, %v1327
      %v1353 = vpack.c.b16 %v1328, %v1328
      %1379 = vst [vmem:[%s170] sm:$0xf] %v1329
      %1380 = vst [vmem:[%s170 + $0x4] sm:$0xf] %v1330
      %1381 = vst [vmem:[%s170 + $0x8] sm:$0xf] %v1331
      %1382 = vst [vmem:[%s170 + $0xc] sm:$0xf] %v1332
      %1383 = vst [vmem:[%s170 + $0x10] sm:$0xf] %v1333
      %1384 = vst [vmem:[%s170 + $0x14] sm:$0xf] %v1334
      %1385 = vst [vmem:[%s170 + $0x18] sm:$0xf] %v1335
      %1386 = vst [vmem:[%s170 + $0x1c] sm:$0xf] %v1336
      %1387 = vst [vmem:[%s170 + $0x20] sm:$0xf] %v1337
      %1388 = vst [vmem:[%s170 + $0x24] sm:$0xf] %v1338
      %1389 = vst [vmem:[%s170 + $0x28] sm:$0xf] %v1339
      %1390 = vst [vmem:[%s170 + $0x2c] sm:$0xf] %v1340
      %1391 = vst [vmem:[%s170 + $0x30] sm:$0xf] %v1341
      %1392 = vst [vmem:[%s170 + $0x34] sm:$0xf] %v1342
      %1393 = vst [vmem:[%s170 + $0x38] sm:$0xf] %v1343
      %1394 = vst [vmem:[%s170 + $0x3c] sm:$0xf] %v1344
      %1395 = vst [vmem:[%s170 + $0x40] sm:$0xf] %v1345
      %1396 = vst [vmem:[%s170 + $0x44] sm:$0xf] %v1346
      %1397 = vst [vmem:[%s170 + $0x48] sm:$0xf] %v1347
      %1398 = vst [vmem:[%s170 + $0x4c] sm:$0xf] %v1348
      %1399 = vst [vmem:[%s170 + $0x50] sm:$0xf] %v1349
      %1400 = vst [vmem:[%s170 + $0x54] sm:$0xf] %v1350
      %1401 = vst [vmem:[%s170 + $0x58] sm:$0xf] %v1351
      %1402 = vst [vmem:[%s170 + $0x5c] sm:$0xf] %v1352
      %1403 = vst [vmem:[%s170 + $0x60] sm:$0xf] %v1353
      %p1404 = scmp.lt.s32.totalorder %s14, 1
      %s1405 = scalar_select %p1404, %s14, 1
      %s1406 = smul.addr %s1405, 25
      %s1407 = smul.addr %s1406, 4
      %s1408 = scalar_lea.vmem %s3, %s1407
      // Predicated region
      $region33: #{net_cifar10_forward.3} parent=31 // pred_check
        %p1409 = pneg %p100
      $region34: #{net_cifar10_forward.3} parent=31 // pred_check_branch
        %1411 = sbr.rel (%p1409) target = $region36
      $region35: #{net_cifar10_forward.3} parent=31 // pred_region
        _
      $region36: #{net_cifar10_forward.3} parent=31 // pred_fallthru
        _
    $region32: #{net_cifar10_forward.3} parent=5 // pred_fallthru
      _
    %p1412 = scmp.le.s32.totalorder 2, %s9
    // Predicated region
    $region37: #{net_cifar10_forward.3} parent=5 // pred_check
      %p1413 = pneg %p1412
    $region38: #{net_cifar10_forward.3} parent=5 // pred_check_branch
      %1415 = sbr.rel (%p1413) target = $region40
    $region39: #{net_cifar10_forward.3} parent=5 // pred_region
      %s1416 = ssub.s32 %s9, 2
      // Predicated region
      $region41: #{net_cifar10_forward.3} parent=39 // pred_check
        %p1417 = pneg %p106
      $region42: #{net_cifar10_forward.3} parent=39 // pred_check_branch
        %1419 = sbr.rel (%p1417) target = $region44
      $region43: #{net_cifar10_forward.3} parent=39 // pred_region
        %p1420 = scmp.lt.s32.totalorder %s15, 1
        %s1421 = scalar_select %p1420, %s15, 1
        %s1422 = smul.addr %s1421, 25
        %s1423 = smul.addr %s1422, 4
        %s1424 = scalar_lea.vmem %s3, %s1423
      $region44: #{net_cifar10_forward.3} parent=39 // pred_fallthru
        _
    $region40: #{net_cifar10_forward.3} parent=5 // pred_fallthru
      _
  $region6: #{net_cifar10_forward.3} parent=0 // loop_footer
    %s13 = sadd.s32 1, %s9
  $region7: #{net_cifar10_forward.3} parent=0 // loop_footer_branch
    %8 = sbr.rel target = $region3
  $region8: #{net_cifar10_forward.3} parent=0 // loop_exit
    _

// kernel: net_cifar10_forward.4
$region0: #{net_cifar10_forward.4}
  #allocation0 [shape = 'u32[]', space=smem, size = 0x4, offset = 0x4, fixed_abs, tag = 'smem constant byte address 0x4 - core index']
  #allocation1 [shape = 'u32[144,128]{1,0:T(1,128)}', space=vmem, size = 0x12000, scoped, tag = 'internal scratch']
  %s0 = inlined_call_operand.vmem [shape: bf16[2,128,152], index: 0, kind: input, shape index: {}]
  %s1 = inlined_call_operand.vmem [shape: bf16[152,128], index: 1, kind: input, shape index: {}]
  %s2 = inlined_call_operand.vmem [shape: f32[1,128], index: 2, kind: input, shape index: {}]
  %s3 = inlined_call_operand.vmem [shape: bf16[2,32,128], index: 3, kind: output, shape index: {}]
  %s4 = sld [smem:[#allocation0]]
  $region45: #{net_cifar10_forward.4} parent=0
    _
  %s6 = ssub.s32 1, %s4
  %s7 = scalar_select 0, %s6, %s4
  loop: start=0, step=1, limit=4
  $region2: #{net_cifar10_forward.4} parent=0 // loop_pre_header
    _
  $region3: #{net_cifar10_forward.4} parent=0 // loop_header
    %s9 = sphi 0, %s13
    %p10 = scmp.ge.s32.totalorder %s9, 4
    %s19 = sphi 0, %s21
    %s22 = sphi 0, %s19
    %s23 = sphi 0, %s22
    %s39 = sphi 0, %s23
    %s43 = sphi 0, %s43
    %s45 = sphi 0, %s43
    %s46 = sphi 0, %s45
    %s60 = sphi 0, %s46
    %s64 = sphi 0, %s64
    %s66 = sphi 0, %s64
    %s67 = sphi 0, %s66
    %s81 = sphi 0, %s67
    %s87 = sphi 0, %s89
    %s90 = sphi 0, %s87
    %s91 = sphi 0, %s90
    %s107 = sphi 0, %s91
  $region4: #{net_cifar10_forward.4} parent=0 // loop_header_branch
    %12 = sbr.rel (%p10) target = $region8
  $region5: #{net_cifar10_forward.4} parent=0 // loop_body
    %s14 = ssub.s32 %s9, 1
    %s15 = ssub.s32 %s9, 2
    %s16 = sadd.s32 %s9, 1
    %s17 = ssub.s32 %s9, %s16
    %p18 = scmp.eq.s32.totalorder %s17, 0
    %s20 = sadd.s32 %s19, 1
    %s21 = scalar_select %p18, %s19, %s20
    %p24 = pneg %p18
    %p25 = scmp.eq.s32.totalorder %s9, 1
    %p26 = por %p24, %p25
    %p27 = scmp.ne.s32.totalorder %s19, %s22
    %p28 = scmp.eq.s32.totalorder %s9, 0
    %p29 = por %p27, %p28
    %p30 = scmp.ne.s32.totalorder %s19, %s22
    %p31 = scmp.eq.s32.totalorder %s14, 1
    %p32 = por %p30, %p31
    %p33 = scmp.ne.s32.totalorder %s22, %s23
    %p34 = scmp.eq.s32.totalorder %s14, 0
    %p35 = por %p33, %p34
    %p36 = scmp.ne.s32.totalorder %s22, %s23
    %p37 = scmp.eq.s32.totalorder %s15, 1
    %p38 = por %p36, %p37
    %p40 = scmp.ne.s32.totalorder %s23, %s39
    %p41 = scmp.eq.s32.totalorder %s15, 0
    %p42 = por %p40, %p41
    %s44 = sadd.s32 %s43, 1
    %p47 = scmp.eq.s32.totalorder %s9, 1
    %p48 = scmp.ne.s32.totalorder %s43, %s45
    %p49 = scmp.eq.s32.totalorder %s9, 0
    %p50 = por %p48, %p49
    %p51 = scmp.ne.s32.totalorder %s43, %s45
    %p52 = scmp.eq.s32.totalorder %s14, 1
    %p53 = por %p51, %p52
    %p54 = scmp.ne.s32.totalorder %s45, %s46
    %p55 = scmp.eq.s32.totalorder %s14, 0
    %p56 = por %p54, %p55
    %p57 = scmp.ne.s32.totalorder %s45, %s46
    %p58 = scmp.eq.s32.totalorder %s15, 1
    %p59 = por %p57, %p58
    %p61 = scmp.ne.s32.totalorder %s46, %s60
    %p62 = scmp.eq.s32.totalorder %s15, 0
    %p63 = por %p61, %p62
    %s65 = sadd.s32 %s64, 1
    %p68 = scmp.eq.s32.totalorder %s9, 1
    %p69 = scmp.ne.s32.totalorder %s64, %s66
    %p70 = scmp.eq.s32.totalorder %s9, 0
    %p71 = por %p69, %p70
    %p72 = scmp.ne.s32.totalorder %s64, %s66
    %p73 = scmp.eq.s32.totalorder %s14, 1
    %p74 = por %p72, %p73
    %p75 = scmp.ne.s32.totalorder %s66, %s67
    %p76 = scmp.eq.s32.totalorder %s14, 0
    %p77 = por %p75, %p76
    %p78 = scmp.ne.s32.totalorder %s66, %s67
    %p79 = scmp.eq.s32.totalorder %s15, 1
    %p80 = por %p78, %p79
    %p82 = scmp.ne.s32.totalorder %s67, %s81
    %p83 = scmp.eq.s32.totalorder %s15, 0
    %p84 = por %p82, %p83
    %s85 = ssub.s32 %s9, %s16
    %p86 = scmp.eq.s32.totalorder %s85, 0
    %s88 = sadd.s32 %s87, 1
    %s89 = scalar_select %p86, %s87, %s88
    %p92 = pneg %p86
    %p93 = scmp.eq.s32.totalorder %s9, 1
    %p94 = por %p92, %p93
    %p95 = scmp.ne.s32.totalorder %s87, %s90
    %p96 = scmp.eq.s32.totalorder %s9, 0
    %p97 = por %p95, %p96
    %p98 = scmp.ne.s32.totalorder %s87, %s90
    %p99 = scmp.eq.s32.totalorder %s14, 1
    %p100 = por %p98, %p99
    %p101 = scmp.ne.s32.totalorder %s90, %s91
    %p102 = scmp.eq.s32.totalorder %s14, 0
    %p103 = por %p101, %p102
    %p104 = scmp.ne.s32.totalorder %s90, %s91
    %p105 = scmp.eq.s32.totalorder %s15, 1
    %p106 = por %p104, %p105
    %p108 = scmp.ne.s32.totalorder %s91, %s107
    %p109 = scmp.eq.s32.totalorder %s15, 0
    %p110 = por %p108, %p109
    %p111 = scmp.le.s32.totalorder 1, %s9
    %p112 = scmp.lt.s32.totalorder %s9, 3
    %p113 = pnand %p111, %p112
    %p114 = pneg %p113
    // Predicated region
    $region9: #{net_cifar10_forward.4} parent=5 // pred_check
      _
    $region10: #{net_cifar10_forward.4} parent=5 // pred_check_branch
      %116 = sbr.rel (%p113) target = $region12
    $region11: #{net_cifar10_forward.4} parent=5 // pred_region
      %s117 = ssub.s32 %s9, 1
      // Predicated region
      $region13: #{net_cifar10_forward.4} parent=11 // pred_check
        %p118 = pneg %p56
      $region14: #{net_cifar10_forward.4} parent=11 // pred_check_branch
        %120 = sbr.rel (%p118) target = $region16
      $region15: #{net_cifar10_forward.4} parent=11 // pred_region
        _
      $region16: #{net_cifar10_forward.4} parent=11 // pred_fallthru
        _
      // Predicated region
      $region17: #{net_cifar10_forward.4} parent=11 // pred_check
        %p121 = pneg %p77
      $region18: #{net_cifar10_forward.4} parent=11 // pred_check_branch
        %123 = sbr.rel (%p121) target = $region20
      $region19: #{net_cifar10_forward.4} parent=11 // pred_region
        _
      $region20: #{net_cifar10_forward.4} parent=11 // pred_fallthru
        _
    $region12: #{net_cifar10_forward.4} parent=5 // pred_fallthru
      _
    %p124 = scmp.lt.s32.totalorder %s9, 2
    // Predicated region
    $region21: #{net_cifar10_forward.4} parent=5 // pred_check
      %p125 = pneg %p124
    $region22: #{net_cifar10_forward.4} parent=5 // pred_check_branch
      %127 = sbr.rel (%p125) target = $region24
    $region23: #{net_cifar10_forward.4} parent=5 // pred_region
      // Predicated region
      $region25: #{net_cifar10_forward.4} parent=23 // pred_check
        %p128 = pneg %p29
      $region26: #{net_cifar10_forward.4} parent=23 // pred_check_branch
        %130 = sbr.rel (%p128) target = $region28
      $region27: #{net_cifar10_forward.4} parent=23 // pred_region
        %p131 = scmp.lt.s32.totalorder %s9, 1
        %s132 = scalar_select %p131, %s9, 1
        %s133 = smul.addr %s132, 32
        %s134 = smul.addr %s133, 4
        %s135 = scalar_lea.vmem %s0, %s134
      $region28: #{net_cifar10_forward.4} parent=23 // pred_fallthru
        _
    $region24: #{net_cifar10_forward.4} parent=5 // pred_fallthru
      _
    %p136 = scmp.le.s32.totalorder 1, %s9
    %p137 = scmp.lt.s32.totalorder %s9, 3
    %p138 = pnand %p136, %p137
    %p139 = pneg %p138
    // Predicated region
    $region29: #{net_cifar10_forward.4} parent=5 // pred_check
      _
    $region30: #{net_cifar10_forward.4} parent=5 // pred_check_branch
      %141 = sbr.rel (%p138) target = $region32
    $region31: #{net_cifar10_forward.4} parent=5 // pred_region
      %s142 = ssub.s32 %s9, 1
      %p143 = scmp.lt.s32.totalorder %s14, 1
      %s144 = scalar_select %p143, %s14, 1
      %s145 = smul.addr %s144, 32
      %s146 = smul.addr %s145, 4
      %s147 = scalar_lea.vmem %s0, %s146
      %p148 = pneg %p35
      %p149 = pneg %p32
      %p150 = pneg %p56
      %p151 = pneg %p53
      %p152 = pneg %p77
      %p153 = pneg %p74
      %p154 = pneg %p103
      %p155 = pneg %p100
      %p156 = scmp.lt.s32.totalorder %s14, 1
      %s157 = scalar_select %p156, %s14, 1
      %s158 = smul.addr %s157, 4
      %s159 = smul.addr %s158, 4
      %s160 = scalar_lea.vmem %s3, %s159
      %p161 = scmp.lt.s32.totalorder %s14, 1
      %s162 = scalar_select %p161, %s14, 1
      %s163 = smul.addr %s162, 32
      %s164 = smul.addr %s163, 4
      %s165 = scalar_lea.vmem %s0, %s164
      %p166 = scmp.lt.s32.totalorder %s14, 1
      %s167 = scalar_select %p166, %s14, 1
      %s168 = smul.addr %s167, 4
      %s169 = smul.addr %s168, 4
      %s170 = scalar_lea.vmem %s3, %s169
      %v172 = vld [vmem:[%s165] sm:$0xff]
      %v173 = vld [vmem:[%s165 + $0x8] sm:$0xff]
      %v174 = vld [vmem:[%s165 + $0x10] sm:$0xff]
      %v175 = vld [vmem:[%s165 + $0x18] sm:$0xff]
      %v176 = vld [vmem:[%s165 + $0x20] sm:$0xff]
      %v177 = vld [vmem:[%s165 + $0x28] sm:$0xff]
      %v178 = vld [vmem:[%s165 + $0x30] sm:$0xff]
      %v179 = vld [vmem:[%s165 + $0x38] sm:$0xff]
      %v180 = vld [vmem:[%s165 + $0x40] sm:$0xff]
      %v181 = vld [vmem:[%s165 + $0x48] sm:$0xff]
      %v182 = vld [vmem:[%s165 + $0x50] sm:$0xff]
      %v183 = vld [vmem:[%s165 + $0x58] sm:$0xff]
      %v184 = vld [vmem:[%s165 + $0x60] sm:$0xff]
      %v185 = vld [vmem:[%s165 + $0x68] sm:$0xff]
      %v186 = vld [vmem:[%s165 + $0x70] sm:$0xff]
      %v187 = vld [vmem:[%s165 + $0x78] sm:$0xff]
      %v188 = vld [vmem:[%s1] sm:$0xf]
      %v189 = vld [vmem:[%s1 + $0x4] sm:$0xf]
      %v190 = vld [vmem:[%s1 + $0x8] sm:$0xf]
      %v191 = vld [vmem:[%s1 + $0xc] sm:$0xf]
      %v192 = vld [vmem:[%s1 + $0x10] sm:$0xf]
      %v193 = vld [vmem:[%s1 + $0x14] sm:$0xf]
      %v194 = vld [vmem:[%s1 + $0x18] sm:$0xf]
      %v195 = vld [vmem:[%s1 + $0x1c] sm:$0xf]
      %v196 = vld [vmem:[%s1 + $0x20] sm:$0xf]
      %v197 = vld [vmem:[%s1 + $0x24] sm:$0xf]
      %v198 = vld [vmem:[%s1 + $0x28] sm:$0xf]
      %v199 = vld [vmem:[%s1 + $0x2c] sm:$0xf]
      %v200 = vld [vmem:[%s1 + $0x30] sm:$0xf]
      %v201 = vld [vmem:[%s1 + $0x34] sm:$0xf]
      %v202 = vld [vmem:[%s1 + $0x38] sm:$0xf]
      %v203 = vld [vmem:[%s1 + $0x3c] sm:$0xf]
      %v204 = vld [vmem:[%s1 + $0x40] sm:$0xf]
      %v205 = vld [vmem:[%s1 + $0x44] sm:$0xf]
      %v206 = vld [vmem:[%s1 + $0x48] sm:$0xf]
      %v223 = vunpack.c.l.b16 %v172
      %v224 = vunpack.c.h.b16 %v172
      %v225 = vunpack.c.l.b16 %v173
      %v226 = vunpack.c.h.b16 %v173
      %v227 = vunpack.c.l.b16 %v174
      %v228 = vunpack.c.h.b16 %v174
      %v229 = vunpack.c.l.b16 %v175
      %v230 = vunpack.c.h.b16 %v175
      %v231 = vunpack.c.l.b16 %v176
      %v232 = vunpack.c.h.b16 %v176
      %v233 = vunpack.c.l.b16 %v177
      %v234 = vunpack.c.h.b16 %v177
      %v235 = vunpack.c.l.b16 %v178
      %v236 = vunpack.c.h.b16 %v178
      %v237 = vunpack.c.l.b16 %v179
      %v238 = vunpack.c.h.b16 %v179
      %v239 = vunpack.c.l.b16 %v180
      %v240 = vunpack.c.h.b16 %v180
      %v241 = vunpack.c.l.b16 %v181
      %v242 = vunpack.c.h.b16 %v181
      %v243 = vunpack.c.l.b16 %v182
      %v244 = vunpack.c.h.b16 %v182
      %v245 = vunpack.c.l.b16 %v183
      %v246 = vunpack.c.h.b16 %v183
      %v247 = vunpack.c.l.b16 %v184
      %v248 = vunpack.c.h.b16 %v184
      %v249 = vunpack.c.l.b16 %v185
      %v250 = vunpack.c.h.b16 %v185
      %v251 = vunpack.c.l.b16 %v186
      %v252 = vunpack.c.h.b16 %v186
      %v253 = vunpack.c.l.b16 %v187
      %v254 = vunpack.c.h.b16 %v187
      %v255 = vpack.c.b16 %v225, %v223
      %v256 = vpack.c.b16 %v226, %v224
      %v257 = vpack.c.b16 %v229, %v227
      %v258 = vpack.c.b16 %v230, %v228
      %v259 = vpack.c.b16 %v233, %v231
      %v260 = vpack.c.b16 %v234, %v232
      %v261 = vpack.c.b16 %v237, %v235
      %v262 = vpack.c.b16 %v238, %v236
      %v263 = vpack.c.b16 %v241, %v239
      %v264 = vpack.c.b16 %v242, %v240
      %v265 = vpack.c.b16 %v245, %v243
      %v266 = vpack.c.b16 %v246, %v244
      %v267 = vpack.c.b16 %v249, %v247
      %v268 = vpack.c.b16 %v250, %v248
      %v269 = vpack.c.b16 %v253, %v251
      %v270 = vpack.c.b16 %v254, %v252
      %v298 = vunpack.c.l.b16 %v188
      %v299 = vunpack.c.l.b16 %v189
      %v300 = vunpack.c.l.b16 %v190
      %v301 = vunpack.c.l.b16 %v191
      %v302 = vunpack.c.l.b16 %v192
      %v303 = vunpack.c.l.b16 %v193
      %v304 = vunpack.c.l.b16 %v194
      %v305 = vunpack.c.l.b16 %v195
      %v306 = vunpack.c.l.b16 %v196
      %v307 = vunpack.c.l.b16 %v197
      %v308 = vunpack.c.l.b16 %v198
      %v309 = vunpack.c.l.b16 %v199
      %v310 = vunpack.c.l.b16 %v200
      %v311 = vunpack.c.l.b16 %v201
      %v312 = vunpack.c.l.b16 %v202
      %v313 = vunpack.c.l.b16 %v203
      %v314 = vunpack.c.l.b16 %v204
      %v315 = vunpack.c.l.b16 %v205
      %v316 = vunpack.c.l.b16 %v206
      %v317 = vpack.c.b16 %v299, %v298
      %v318 = vpack.c.b16 %v301, %v300
      %v319 = vpack.c.b16 %v303, %v302
      %v320 = vpack.c.b16 %v305, %v304
      %v321 = vpack.c.b16 %v307, %v306
      %v322 = vpack.c.b16 %v309, %v308
      %v323 = vpack.c.b16 %v311, %v310
      %v324 = vpack.c.b16 %v313, %v312
      %v325 = vpack.c.b16 %v315, %v314
      %v326 = vpack.c.b16 %v316, %v316
      %vm336 = vcmask 195584
      %v338 = vsel %vm336, %v256, 0
      %v341 = vsel %vm336, %v258, 0
      %v344 = vsel %vm336, %v260, 0
      %v347 = vsel %vm336, %v262, 0
      %v350 = vsel %vm336, %v264, 0
      %v353 = vsel %vm336, %v266, 0
      %v356 = vsel %vm336, %v268, 0
      %v359 = vsel %vm336, %v270, 0
      %vm361 = vcmask 1043456
      %v363 = vsel %vm361, %v326, 0
      %365 = vmatprep.subr.bf16.mxu0 0
      %366 = vmatpush1.bf16.msra.mxu0 %v317
      %367 = vmatprep.subr.bf16.mxu0 0
      %368 = vmatpush1.bf16.msra.mxu0 %v318
      %369 = vmatprep.subr.bf16.mxu0 0
      %370 = vmatpush1.bf16.msra.mxu0 %v319
      %371 = vmatprep.subr.bf16.mxu0 0
      %372 = vmatpush1.bf16.msra.mxu0 %v320
      %373 = vmatprep.subr.bf16.mxu0 0
      %374 = vmatpush1.bf16.msra.mxu0 %v321
      %375 = vmatprep.subr.bf16.mxu0 0
      %376 = vmatpush1.bf16.msra.mxu0 %v322
      %377 = vmatprep.subr.bf16.mxu0 0
      %378 = vmatpush1.bf16.msra.mxu0 %v323
      %379 = vmatprep.subr.bf16.mxu0 0
      %380 = vmatpush1.bf16.msra.mxu0 %v324
      %381 = vmatprep.subr.bf16.mxu0 0
      %382 = vmatpush1.bf16.msra.mxu0 %v325
      %383 = vmatprep.subr.bf16.mxu0 0
      %384 = vmatpush1.bf16.msra.mxu0 %v363
      %385 = vmatprep.subr.bf16.mxu0 0
      %386 = vmatpush1.bf16.msra.mxu0 0
      %387 = vmatprep.subr.bf16.mxu0 0
      %388 = vmatpush1.bf16.msra.mxu0 0
      %389 = vmatprep.subr.bf16.mxu0 0
      %390 = vmatpush1.bf16.msra.mxu0 0
      %391 = vmatprep.subr.bf16.mxu0 0
      %392 = vmatpush1.bf16.msra.mxu0 0
      %393 = vmatprep.subr.bf16.mxu0 0
      %394 = vmatpush1.bf16.msra.mxu0 0
      %395 = vmatprep.subr.bf16.mxu0 0
      %396 = vmatpush1.bf16.msra.mxu0 0
      %397 = vmatprep.mubr.bf16.mxu0 %v338
      %398 = vmatmul.mubr.bf16.gmra.mrb[0].mxu0 %v255
      %v399 = vpop.f32.mrb[0].mxu0
      %v400 = vadd.f32 0.0, %v399
      %v401 = vpop.f32.mrb[0].mxu0
      %v402 = vpop.f32.mrb[0].mxu0
      %v403 = vadd.f32 0.0, %v402
      %v404 = vpop.f32.mrb[0].mxu0
      %405 = vmatprep.mubr.bf16.mxu0 %v341
      %406 = vmatmul.mubr.bf16.gmra.mrb[0].mxu0 %v257
      %v407 = vpop.f32.mrb[0].mxu0
      %v408 = vadd.f32 0.0, %v407
      %v409 = vpop.f32.mrb[0].mxu0
      %v410 = vpop.f32.mrb[0].mxu0
      %v411 = vadd.f32 0.0, %v410
      %v412 = vpop.f32.mrb[0].mxu0
      %413 = vmatprep.mubr.bf16.mxu0 %v344
      %414 = vmatmul.mubr.bf16.gmra.mrb[0].mxu0 %v259
      %v415 = vpop.f32.mrb[0].mxu0
      %v416 = vadd.f32 0.0, %v415
      %v417 = vpop.f32.mrb[0].mxu0
      %v418 = vpop.f32.mrb[0].mxu0
      %v419 = vadd.f32 0.0, %v418
      %v420 = vpop.f32.mrb[0].mxu0
      %421 = vmatprep.mubr.bf16.mxu0 %v347
      %422 = vmatmul.mubr.bf16.gmra.mrb[0].mxu0 %v261
      %v423 = vpop.f32.mrb[0].mxu0
      %v424 = vadd.f32 0.0, %v423
      %v425 = vpop.f32.mrb[0].mxu0
      %v426 = vpop.f32.mrb[0].mxu0
      %v427 = vadd.f32 0.0, %v426
      %v428 = vpop.f32.mrb[0].mxu0
      %429 = vmatprep.mubr.bf16.mxu0 %v350
      %430 = vmatmul.mubr.bf16.gmra.mrb[0].mxu0 %v263
      %v431 = vpop.f32.mrb[0].mxu0
      %v432 = vadd.f32 0.0, %v431
      %v433 = vpop.f32.mrb[0].mxu0
      %v434 = vpop.f32.mrb[0].mxu0
      %v435 = vadd.f32 0.0, %v434
      %v436 = vpop.f32.mrb[0].mxu0
      %437 = vmatprep.mubr.bf16.mxu0 %v353
      %438 = vmatmul.mubr.bf16.gmra.mrb[0].mxu0 %v265
      %v439 = vpop.f32.mrb[0].mxu0
      %v440 = vadd.f32 0.0, %v439
      %v441 = vpop.f32.mrb[0].mxu0
      %v442 = vpop.f32.mrb[0].mxu0
      %v443 = vadd.f32 0.0, %v442
      %v444 = vpop.f32.mrb[0].mxu0
      %445 = vmatprep.mubr.bf16.mxu0 %v356
      %446 = vmatmul.mubr.bf16.gmra.mrb[0].mxu0 %v267
      %v447 = vpop.f32.mrb[0].mxu0
      %v448 = vadd.f32 0.0, %v447
      %v449 = vpop.f32.mrb[0].mxu0
      %v450 = vpop.f32.mrb[0].mxu0
      %v451 = vadd.f32 0.0, %v450
      %v452 = vpop.f32.mrb[0].mxu0
      %453 = vmatprep.mubr.bf16.mxu0 %v359
      %454 = vmatmul.mubr.bf16.gmra.mrb[0].mxu0 %v269
      %v455 = vpop.f32.mrb[0].mxu0
      %v456 = vadd.f32 0.0, %v455
      %v457 = vpop.f32.mrb[0].mxu0
      %v458 = vpop.f32.mrb[0].mxu0
      %v459 = vadd.f32 0.0, %v458
      %v460 = vpop.f32.mrb[0].mxu0
      %461 = vdwg.mxu0
      %v462 = vmax.f32 %v400, %v416
      %v463 = vmax.f32 %v403, %v419
      %v464 = vmax.f32 %v408, %v424
      %v465 = vmax.f32 %v411, %v427
      %v466 = vmax.f32 %v432, %v448
      %v467 = vmax.f32 %v435, %v451
      %v468 = vmax.f32 %v440, %v456
      %v469 = vmax.f32 %v443, %v459
      %v470 = vmax.f32 %v462, %v466
      %v471 = vmax.f32 %v463, %v467
      %v472 = vmax.f32 %v464, %v468
      %v473 = vmax.f32 %v465, %v469
      %v474 = vld [vmem:[%s2] sm:$0x1]
      %v476 = vlaneseq
      %v477 = vshrl.u32 %v476, 7
      %v478 = vsub.s32 0, %v477
      %v479 = vrot.slane %v474, %v478
      %v481 = vadd.f32 %v470, %v479
      %v482 = vadd.f32 %v471, %v479
      %v483 = vadd.f32 %v472, %v479
      %v484 = vadd.f32 %v473, %v479
      %v485 = vmax.f32 %v481, 0.0
      %v486 = vmax.f32 %v482, 0.0
      %v487 = vmax.f32 %v483, 0.0
      %v488 = vmax.f32 %v484, 0.0
      %v489 = vpack.c.bf16 %v486, %v485
      %v490 = vpack.c.bf16 %v488, %v487
      %v493 = vunpack.c.l.b16 %v489
      %v494 = vunpack.c.h.b16 %v489
      %v495 = vunpack.c.l.b16 %v490
      %v496 = vunpack.c.h.b16 %v490
      %v497 = vpack.c.b16 %v493, %v493
      %v498 = vpack.c.b16 %v494, %v494
      %v499 = vpack.c.b16 %v495, %v495
      %v500 = vpack.c.b16 %v496, %v496
      %505 = vst [vmem:[%s170] sm:$0xf] %v497
      %506 = vst [vmem:[%s170 + $0x4] sm:$0xf] %v498
      %507 = vst [vmem:[%s170 + $0x8] sm:$0xf] %v499
      %508 = vst [vmem:[%s170 + $0xc] sm:$0xf] %v500
      %p509 = scmp.lt.s32.totalorder %s14, 1
      %s510 = scalar_select %p509, %s14, 1
      %s511 = smul.addr %s510, 4
      %s512 = smul.addr %s511, 4
      %s513 = scalar_lea.vmem %s3, %s512
      // Predicated region
      $region33: #{net_cifar10_forward.4} parent=31 // pred_check
        %p514 = pneg %p100
      $region34: #{net_cifar10_forward.4} parent=31 // pred_check_branch
        %516 = sbr.rel (%p514) target = $region36
      $region35: #{net_cifar10_forward.4} parent=31 // pred_region
        _
      $region36: #{net_cifar10_forward.4} parent=31 // pred_fallthru
        _
    $region32: #{net_cifar10_forward.4} parent=5 // pred_fallthru
      _
    %p517 = scmp.le.s32.totalorder 2, %s9
    // Predicated region
    $region37: #{net_cifar10_forward.4} parent=5 // pred_check
      %p518 = pneg %p517
    $region38: #{net_cifar10_forward.4} parent=5 // pred_check_branch
      %520 = sbr.rel (%p518) target = $region40
    $region39: #{net_cifar10_forward.4} parent=5 // pred_region
      %s521 = ssub.s32 %s9, 2
      // Predicated region
      $region41: #{net_cifar10_forward.4} parent=39 // pred_check
        %p522 = pneg %p106
      $region42: #{net_cifar10_forward.4} parent=39 // pred_check_branch
        %524 = sbr.rel (%p522) target = $region44
      $region43: #{net_cifar10_forward.4} parent=39 // pred_region
        %p525 = scmp.lt.s32.totalorder %s15, 1
        %s526 = scalar_select %p525, %s15, 1
        %s527 = smul.addr %s526, 4
        %s528 = smul.addr %s527, 4
        %s529 = scalar_lea.vmem %s3, %s528
      $region44: #{net_cifar10_forward.4} parent=39 // pred_fallthru
        _
    $region40: #{net_cifar10_forward.4} parent=5 // pred_fallthru
      _
  $region6: #{net_cifar10_forward.4} parent=0 // loop_footer
    %s13 = sadd.s32 1, %s9
  $region7: #{net_cifar10_forward.4} parent=0 // loop_footer_branch
    %8 = sbr.rel target = $region3
  $region8: #{net_cifar10_forward.4} parent=0 // loop_exit
    _

// kernel: net_cifar10_forward.5
$region0: #{net_cifar10_forward.5}
  #allocation0 [shape = 'u32[]', space=smem, size = 0x4, offset = 0x4, fixed_abs, tag = 'smem constant byte address 0x4 - core index']
  #allocation1 [shape = 'u32[144,128]{1,0:T(1,128)}', space=vmem, size = 0x12000, scoped, tag = 'internal scratch']
  %s0 = inlined_call_operand.vmem [shape: bf16[2,400], index: 0, kind: input, shape index: {}]
  %s1 = inlined_call_operand.vmem [shape: bf16[400,128], index: 1, kind: input, shape index: {}]
  %s2 = inlined_call_operand.vmem [shape: f32[1,128], index: 2, kind: input, shape index: {}]
  %s3 = inlined_call_operand.vmem [shape: bf16[128,128], index: 3, kind: input, shape index: {}]
  %s4 = inlined_call_operand.vmem [shape: f32[1,128], index: 4, kind: input, shape index: {}]
  %s5 = inlined_call_operand.vmem [shape: bf16[128,128], index: 5, kind: input, shape index: {}]
  %s6 = inlined_call_operand.vmem [shape: f32[1,128], index: 6, kind: input, shape index: {}]
  %s7 = inlined_call_operand.hbm [shape: f32[2,128], index: 7, kind: output, shape index: {}]
  %s8 = sld [smem:[#allocation0]]
  $region38: #{net_cifar10_forward.5} parent=0
    _
  %s10 = ssub.s32 1, %s8
  %s11 = scalar_select 0, %s10, %s8
  $region1: #{net_cifar10_forward.5} parent=0
    #allocation2 [shape = 'u8[1024]{0}', space=vmem, size = 0x400, scoped, tag = 'output window, operand 0, single buffered']
    #allocation3 [shape = 's32[1]{0}', space=sflag, size = 0x4, scoped, tag = 'scoped memory for net_cifar10_forward.5']
    %12 = vsyncpa [#allocation3], 0
    // Predicated region
    $region2: #{net_cifar10_forward.5} parent=1 // pred_check
      _
    $region3: #{net_cifar10_forward.5} parent=1 // pred_check_branch
      %14 = sbr.rel (0) target = $region5
    $region4: #{net_cifar10_forward.5} parent=1 // pred_region
      _
    $region5: #{net_cifar10_forward.5} parent=1 // pred_fallthru
      _
    // Predicated region
    $region6: #{net_cifar10_forward.5} parent=1 // pred_check
      _
    $region7: #{net_cifar10_forward.5} parent=1 // pred_check_branch
      %16 = sbr.rel (0) target = $region9
    $region8: #{net_cifar10_forward.5} parent=1 // pred_region
      _
    $region9: #{net_cifar10_forward.5} parent=1 // pred_fallthru
      _
    // Predicated region
    $region10: #{net_cifar10_forward.5} parent=1 // pred_check
      _
    $region11: #{net_cifar10_forward.5} parent=1 // pred_check_branch
      %18 = sbr.rel (0) target = $region13
    $region12: #{net_cifar10_forward.5} parent=1 // pred_region
      _
    $region13: #{net_cifar10_forward.5} parent=1 // pred_fallthru
      _
    // Predicated region
    $region14: #{net_cifar10_forward.5} parent=1 // pred_check
      _
    $region15: #{net_cifar10_forward.5} parent=1 // pred_check_branch
      %20 = sbr.rel (0) target = $region17
    $region16: #{net_cifar10_forward.5} parent=1 // pred_region
      _
    $region17: #{net_cifar10_forward.5} parent=1 // pred_fallthru
      _
    // Predicated region
    $region18: #{net_cifar10_forward.5} parent=1 // pred_check
      _
    $region19: #{net_cifar10_forward.5} parent=1 // pred_check_branch
      %22 = sbr.rel (0) target = $region21
    $region20: #{net_cifar10_forward.5} parent=1 // pred_region
      _
    $region21: #{net_cifar10_forward.5} parent=1 // pred_fallthru
      _
    // Predicated region
    $region22: #{net_cifar10_forward.5} parent=1 // pred_check
      _
    $region23: #{net_cifar10_forward.5} parent=1 // pred_check_branch
      %24 = sbr.rel (0) target = $region25
    $region24: #{net_cifar10_forward.5} parent=1 // pred_region
      _
    $region25: #{net_cifar10_forward.5} parent=1 // pred_fallthru
      _
    // Predicated region
    $region26: #{net_cifar10_forward.5} parent=1 // pred_check
      _
    $region27: #{net_cifar10_forward.5} parent=1 // pred_check_branch
      %26 = sbr.rel (0) target = $region29
    $region28: #{net_cifar10_forward.5} parent=1 // pred_region
      _
    $region29: #{net_cifar10_forward.5} parent=1 // pred_fallthru
      _
    %v28 = vld [vmem:[%s0] sm:$0xf]
    %v29 = vld [vmem:[%s1] sm:$0xf]
    %v30 = vld [vmem:[%s1 + $0x4] sm:$0xf]
    %v31 = vld [vmem:[%s1 + $0x8] sm:$0xf]
    %v32 = vld [vmem:[%s1 + $0xc] sm:$0xf]
    %v33 = vld [vmem:[%s1 + $0x10] sm:$0xf]
    %v34 = vld [vmem:[%s1 + $0x14] sm:$0xf]
    %v35 = vld [vmem:[%s1 + $0x18] sm:$0xf]
    %v36 = vld [vmem:[%s1 + $0x1c] sm:$0xf]
    %v37 = vld [vmem:[%s1 + $0x20] sm:$0xf]
    %v38 = vld [vmem:[%s1 + $0x24] sm:$0xf]
    %v39 = vld [vmem:[%s1 + $0x28] sm:$0xf]
    %v40 = vld [vmem:[%s1 + $0x2c] sm:$0xf]
    %v41 = vld [vmem:[%s1 + $0x30] sm:$0xf]
    %v42 = vld [vmem:[%s1 + $0x34] sm:$0xf]
    %v43 = vld [vmem:[%s1 + $0x38] sm:$0xf]
    %v44 = vld [vmem:[%s1 + $0x3c] sm:$0xf]
    %v45 = vld [vmem:[%s1 + $0x40] sm:$0xf]
    %v46 = vld [vmem:[%s1 + $0x44] sm:$0xf]
    %v47 = vld [vmem:[%s1 + $0x48] sm:$0xf]
    %v48 = vld [vmem:[%s1 + $0x4c] sm:$0xf]
    %v49 = vld [vmem:[%s1 + $0x50] sm:$0xf]
    %v50 = vld [vmem:[%s1 + $0x54] sm:$0xf]
    %v51 = vld [vmem:[%s1 + $0x58] sm:$0xf]
    %v52 = vld [vmem:[%s1 + $0x5c] sm:$0xf]
    %v53 = vld [vmem:[%s1 + $0x60] sm:$0xf]
    %v54 = vld [vmem:[%s1 + $0x64] sm:$0xf]
    %v55 = vld [vmem:[%s1 + $0x68] sm:$0xf]
    %v56 = vld [vmem:[%s1 + $0x6c] sm:$0xf]
    %v57 = vld [vmem:[%s1 + $0x70] sm:$0xf]
    %v58 = vld [vmem:[%s1 + $0x74] sm:$0xf]
    %v59 = vld [vmem:[%s1 + $0x78] sm:$0xf]
    %v60 = vld [vmem:[%s1 + $0x7c] sm:$0xf]
    %v61 = vld [vmem:[%s1 + $0x80] sm:$0xf]
    %v62 = vld [vmem:[%s1 + $0x84] sm:$0xf]
    %v63 = vld [vmem:[%s1 + $0x88] sm:$0xf]
    %v64 = vld [vmem:[%s1 + $0x8c] sm:$0xf]
    %v65 = vld [vmem:[%s1 + $0x90] sm:$0xf]
    %v66 = vld [vmem:[%s1 + $0x94] sm:$0xf]
    %v67 = vld [vmem:[%s1 + $0x98] sm:$0xf]
    %v68 = vld [vmem:[%s1 + $0x9c] sm:$0xf]
    %v69 = vld [vmem:[%s1 + $0xa0] sm:$0xf]
    %v70 = vld [vmem:[%s1 + $0xa4] sm:$0xf]
    %v71 = vld [vmem:[%s1 + $0xa8] sm:$0xf]
    %v72 = vld [vmem:[%s1 + $0xac] sm:$0xf]
    %v73 = vld [vmem:[%s1 + $0xb0] sm:$0xf]
    %v74 = vld [vmem:[%s1 + $0xb4] sm:$0xf]
    %v75 = vld [vmem:[%s1 + $0xb8] sm:$0xf]
    %v76 = vld [vmem:[%s1 + $0xbc] sm:$0xf]
    %v77 = vld [vmem:[%s1 + $0xc0] sm:$0xf]
    %v78 = vld [vmem:[%s1 + $0xc4] sm:$0xf]
    %v79 = vld [vmem:[%s2] sm:$0x1]
    %v81 = vlaneseq
    %v82 = vshrl.u32 %v81, 7
    %v83 = vsub.s32 0, %v82
    %v84 = vrot.slane %v79, %v83
    %v88 = vunpack.c.l.s4 1966171168
    %v89 = vunpack.c.0.s8 %v88
    %v90 = vlaneseq
    %v91 = vshrl.u32 %v90, 7
    %v92 = vsub.s32 %v89, %v91
    %v93 = vrot.slane %v28, %v92
    %v94 = vcombine.high %v93, %v93
    %v96 = vunpack.c.l.s4 1966171168
    %v97 = vunpack.c.0.s8 %v96
    %v98 = vlaneseq
    %v99 = vshrl.u32 %v98, 7
    %v100 = vsub.s32 %v97, %v99
    %v101 = vrot.slane %v93, %v100
    %v103 = vunpack.c.l.s4 1966171168
    %v104 = vunpack.c.0.s8 %v103
    %v105 = vlaneseq
    %v106 = vshrl.u32 %v105, 7
    %v107 = vsub.s32 %v104, %v106
    %v108 = vrot.slane %v94, %v107
    %v109 = vcombine.high %v101, %v101
    %v110 = vcombine.high %v108, %v108
    %v164 = vunpack.c.l.b16 %v29
    %v165 = vunpack.c.l.b16 %v30
    %v166 = vunpack.c.l.b16 %v31
    %v167 = vunpack.c.l.b16 %v32
    %v168 = vunpack.c.l.b16 %v33
    %v169 = vunpack.c.l.b16 %v34
    %v170 = vunpack.c.l.b16 %v35
    %v171 = vunpack.c.l.b16 %v36
    %v172 = vunpack.c.l.b16 %v37
    %v173 = vunpack.c.l.b16 %v38
    %v174 = vunpack.c.l.b16 %v39
    %v175 = vunpack.c.l.b16 %v40
    %v176 = vunpack.c.l.b16 %v41
    %v177 = vunpack.c.l.b16 %v42
    %v178 = vunpack.c.l.b16 %v43
    %v179 = vunpack.c.l.b16 %v44
    %v180 = vunpack.c.l.b16 %v45
    %v181 = vunpack.c.l.b16 %v46
    %v182 = vunpack.c.l.b16 %v47
    %v183 = vunpack.c.l.b16 %v48
    %v184 = vunpack.c.l.b16 %v49
    %v185 = vunpack.c.l.b16 %v50
    %v186 = vunpack.c.l.b16 %v51
    %v187 = vunpack.c.l.b16 %v52
    %v188 = vunpack.c.l.b16 %v53
    %v189 = vunpack.c.l.b16 %v54
    %v190 = vunpack.c.l.b16 %v55
    %v191 = vunpack.c.l.b16 %v56
    %v192 = vunpack.c.l.b16 %v57
    %v193 = vunpack.c.l.b16 %v58
    %v194 = vunpack.c.l.b16 %v59
    %v195 = vunpack.c.l.b16 %v60
    %v196 = vunpack.c.l.b16 %v61
    %v197 = vunpack.c.l.b16 %v62
    %v198 = vunpack.c.l.b16 %v63
    %v199 = vunpack.c.l.b16 %v64
    %v200 = vunpack.c.l.b16 %v65
    %v201 = vunpack.c.l.b16 %v66
    %v202 = vunpack.c.l.b16 %v67
    %v203 = vunpack.c.l.b16 %v68
    %v204 = vunpack.c.l.b16 %v69
    %v205 = vunpack.c.l.b16 %v70
    %v206 = vunpack.c.l.b16 %v71
    %v207 = vunpack.c.l.b16 %v72
    %v208 = vunpack.c.l.b16 %v73
    %v209 = vunpack.c.l.b16 %v74
    %v210 = vunpack.c.l.b16 %v75
    %v211 = vunpack.c.l.b16 %v76
    %v212 = vunpack.c.l.b16 %v77
    %v213 = vunpack.c.l.b16 %v78
    %v214 = vpack.c.b16 %v165, %v164
    %v215 = vpack.c.b16 %v167, %v166
    %v216 = vpack.c.b16 %v169, %v168
    %v217 = vpack.c.b16 %v171, %v170
    %v218 = vpack.c.b16 %v173, %v172
    %v219 = vpack.c.b16 %v175, %v174
    %v220 = vpack.c.b16 %v177, %v176
    %v221 = vpack.c.b16 %v179, %v178
    %v222 = vpack.c.b16 %v181, %v180
    %v223 = vpack.c.b16 %v183, %v182
    %v224 = vpack.c.b16 %v185, %v184
    %v225 = vpack.c.b16 %v187, %v186
    %v226 = vpack.c.b16 %v189, %v188
    %v227 = vpack.c.b16 %v191, %v190
    %v228 = vpack.c.b16 %v193, %v192
    %v229 = vpack.c.b16 %v195, %v194
    %v230 = vpack.c.b16 %v197, %v196
    %v231 = vpack.c.b16 %v199, %v198
    %v232 = vpack.c.b16 %v201, %v200
    %v233 = vpack.c.b16 %v203, %v202
    %v234 = vpack.c.b16 %v205, %v204
    %v235 = vpack.c.b16 %v207, %v206
    %v236 = vpack.c.b16 %v209, %v208
    %v237 = vpack.c.b16 %v211, %v210
    %v238 = vpack.c.b16 %v213, %v212
    %vm264 = vcmask 130048
    %v266 = vsel %vm264, %v110, 0
    %268 = vmatprep.subr.bf16.mxu0 0
    %269 = vmatpush1.bf16.msra.mxu0 %v214
    %270 = vmatprep.subr.bf16.mxu0 0
    %271 = vmatpush1.bf16.msra.mxu0 %v215
    %272 = vmatprep.subr.bf16.mxu0 0
    %273 = vmatpush1.bf16.msra.mxu0 %v216
    %274 = vmatprep.subr.bf16.mxu0 0
    %275 = vmatpush1.bf16.msra.mxu0 %v217
    %276 = vmatprep.subr.bf16.mxu0 0
    %277 = vmatpush1.bf16.msra.mxu0 %v218
    %278 = vmatprep.subr.bf16.mxu0 0
    %279 = vmatpush1.bf16.msra.mxu0 %v219
    %280 = vmatprep.subr.bf16.mxu0 0
    %281 = vmatpush1.bf16.msra.mxu0 %v220
    %282 = vmatprep.subr.bf16.mxu0 0
    %283 = vmatpush1.bf16.msra.mxu0 %v221
    %284 = vmatprep.subr.bf16.mxu0 0
    %285 = vmatpush1.bf16.msra.mxu0 %v222
    %286 = vmatprep.subr.bf16.mxu0 0
    %287 = vmatpush1.bf16.msra.mxu0 %v223
    %288 = vmatprep.subr.bf16.mxu0 0
    %289 = vmatpush1.bf16.msra.mxu0 %v224
    %290 = vmatprep.subr.bf16.mxu0 0
    %291 = vmatpush1.bf16.msra.mxu0 %v225
    %292 = vmatprep.subr.bf16.mxu0 0
    %293 = vmatpush1.bf16.msra.mxu0 %v226
    %294 = vmatprep.subr.bf16.mxu0 0
    %295 = vmatpush1.bf16.msra.mxu0 %v227
    %296 = vmatprep.subr.bf16.mxu0 0
    %297 = vmatpush1.bf16.msra.mxu0 %v228
    %298 = vmatprep.subr.bf16.mxu0 0
    %299 = vmatpush1.bf16.msra.mxu0 %v229
    %300 = vmatprep.mubr.bf16.mxu0 %v108
    %301 = vmatmul.mubr.bf16.gmra.mrb[0].mxu0 %v101
    %v302 = vpop.f32.mrb[0].mxu0
    %v303 = vadd.f32 %v84, %v302
    %v304 = vpop.f32.mrb[0].mxu0
    %v305 = vpop.f32.mrb[0].mxu0
    %v306 = vpop.f32.mrb[0].mxu0
    %307 = vdwg.mxu0
    %308 = vmatprep.subr.bf16.mxu0 0
    %309 = vmatpush1.bf16.msra.mxu0 %v230
    %310 = vmatprep.subr.bf16.mxu0 0
    %311 = vmatpush1.bf16.msra.mxu0 %v231
    %312 = vmatprep.subr.bf16.mxu0 0
    %313 = vmatpush1.bf16.msra.mxu0 %v232
    %314 = vmatprep.subr.bf16.mxu0 0
    %315 = vmatpush1.bf16.msra.mxu0 %v233
    %316 = vmatprep.subr.bf16.mxu0 0
    %317 = vmatpush1.bf16.msra.mxu0 %v234
    %318 = vmatprep.subr.bf16.mxu0 0
    %319 = vmatpush1.bf16.msra.mxu0 %v235
    %320 = vmatprep.subr.bf16.mxu0 0
    %321 = vmatpush1.bf16.msra.mxu0 %v236
    %322 = vmatprep.subr.bf16.mxu0 0
    %323 = vmatpush1.bf16.msra.mxu0 %v237
    %324 = vmatprep.subr.bf16.mxu0 0
    %325 = vmatpush1.bf16.msra.mxu0 %v238
    %326 = vmatprep.subr.bf16.mxu0 0
    %327 = vmatpush1.bf16.msra.mxu0 0
    %328 = vmatprep.subr.bf16.mxu0 0
    %329 = vmatpush1.bf16.msra.mxu0 0
    %330 = vmatprep.subr.bf16.mxu0 0
    %331 = vmatpush1.bf16.msra.mxu0 0
    %332 = vmatprep.subr.bf16.mxu0 0
    %333 = vmatpush1.bf16.msra.mxu0 0
    %334 = vmatprep.subr.bf16.mxu0 0
    %335 = vmatpush1.bf16.msra.mxu0 0
    %336 = vmatprep.subr.bf16.mxu0 0
    %337 = vmatpush1.bf16.msra.mxu0 0
    %338 = vmatprep.subr.bf16.mxu0 0
    %339 = vmatpush1.bf16.msra.mxu0 0
    %340 = vmatprep.mubr.bf16.mxu0 %v266
    %341 = vmatmul.mubr.bf16.gmra.mrb[0].mxu0 %v109
    %v342 = vpop.f32.mrb[0].mxu0
    %v343 = vadd.f32 %v303, %v342
    %v344 = vpop.f32.mrb[0].mxu0
    %v345 = vpop.f32.mrb[0].mxu0
    %v346 = vpop.f32.mrb[0].mxu0
    %347 = vdwg.mxu0
    %v348 = vmax.f32 %v343, 0.0
    %v349 = vpack.c.bf16 %v348, %v348
    %v350 = vld [vmem:[%s3] sm:$0xf]
    %v351 = vld [vmem:[%s3 + $0x4] sm:$0xf]
    %v352 = vld [vmem:[%s3 + $0x8] sm:$0xf]
    %v353 = vld [vmem:[%s3 + $0xc] sm:$0xf]
    %v354 = vld [vmem:[%s3 + $0x10] sm:$0xf]
    %v355 = vld [vmem:[%s3 + $0x14] sm:$0xf]
    %v356 = vld [vmem:[%s3 + $0x18] sm:$0xf]
    %v357 = vld [vmem:[%s3 + $0x1c] sm:$0xf]
    %v358 = vld [vmem:[%s3 + $0x20] sm:$0xf]
    %v359 = vld [vmem:[%s3 + $0x24] sm:$0xf]
    %v360 = vld [vmem:[%s3 + $0x28] sm:$0xf]
    %v361 = vld [vmem:[%s3 + $0x2c] sm:$0xf]
    %v362 = vld [vmem:[%s3 + $0x30] sm:$0xf]
    %v363 = vld [vmem:[%s3 + $0x34] sm:$0xf]
    %v364 = vld [vmem:[%s3 + $0x38] sm:$0xf]
    %v365 = vld [vmem:[%s3 + $0x3c] sm:$0xf]
    %v366 = vld [vmem:[%s4] sm:$0x1]
    %v368 = vlaneseq
    %v369 = vshrl.u32 %v368, 7
    %v370 = vsub.s32 0, %v369
    %v371 = vrot.slane %v366, %v370
    %v389 = vunpack.c.l.b16 %v350
    %v390 = vunpack.c.l.b16 %v351
    %v391 = vunpack.c.l.b16 %v352
    %v392 = vunpack.c.l.b16 %v353
    %v393 = vunpack.c.l.b16 %v354
    %v394 = vunpack.c.l.b16 %v355
    %v395 = vunpack.c.l.b16 %v356
    %v396 = vunpack.c.l.b16 %v357
    %v397 = vunpack.c.l.b16 %v358
    %v398 = vunpack.c.l.b16 %v359
    %v399 = vunpack.c.l.b16 %v360
    %v400 = vunpack.c.l.b16 %v361
    %v401 = vunpack.c.l.b16 %v362
    %v402 = vunpack.c.l.b16 %v363
    %v403 = vunpack.c.l.b16 %v364
    %v404 = vunpack.c.l.b16 %v365
    %v405 = vpack.c.b16 %v390, %v389
    %v406 = vpack.c.b16 %v392, %v391
    %v407 = vpack.c.b16 %v394, %v393
    %v408 = vpack.c.b16 %v396, %v395
    %v409 = vpack.c.b16 %v398, %v397
    %v410 = vpack.c.b16 %v400, %v399
    %v411 = vpack.c.b16 %v402, %v401
    %v412 = vpack.c.b16 %v404, %v403
    %421 = vmatprep.subr.bf16.mxu0 0
    %422 = vmatpush1.bf16.msra.mxu0 %v405
    %423 = vmatprep.subr.bf16.mxu0 0
    %424 = vmatpush1.bf16.msra.mxu0 %v406
    %425 = vmatprep.subr.bf16.mxu0 0
    %426 = vmatpush1.bf16.msra.mxu0 %v407
    %427 = vmatprep.subr.bf16.mxu0 0
    %428 = vmatpush1.bf16.msra.mxu0 %v408
    %429 = vmatprep.subr.bf16.mxu0 0
    %430 = vmatpush1.bf16.msra.mxu0 %v409
    %431 = vmatprep.subr.bf16.mxu0 0
    %432 = vmatpush1.bf16.msra.mxu0 %v410
    %433 = vmatprep.subr.bf16.mxu0 0
    %434 = vmatpush1.bf16.msra.mxu0 %v411
    %435 = vmatprep.subr.bf16.mxu0 0
    %436 = vmatpush1.bf16.msra.mxu0 %v412
    %437 = vmatprep.subr.bf16.mxu0 0
    %438 = vmatpush1.bf16.msra.mxu0 0
    %439 = vmatprep.subr.bf16.mxu0 0
    %440 = vmatpush1.bf16.msra.mxu0 0
    %441 = vmatprep.subr.bf16.mxu0 0
    %442 = vmatpush1.bf16.msra.mxu0 0
    %443 = vmatprep.subr.bf16.mxu0 0
    %444 = vmatpush1.bf16.msra.mxu0 0
    %445 = vmatprep.subr.bf16.mxu0 0
    %446 = vmatpush1.bf16.msra.mxu0 0
    %447 = vmatprep.subr.bf16.mxu0 0
    %448 = vmatpush1.bf16.msra.mxu0 0
    %449 = vmatprep.subr.bf16.mxu0 0
    %450 = vmatpush1.bf16.msra.mxu0 0
    %451 = vmatprep.subr.bf16.mxu0 0
    %452 = vmatpush1.bf16.msra.mxu0 0
    %453 = vmatprep.mubr.bf16.mxu0 0
    %454 = vmatmul.mubr.bf16.gmra.mrb[0].mxu0 %v349
    %v455 = vpop.f32.mrb[0].mxu0
    %v456 = vadd.f32 %v371, %v455
    %v457 = vpop.f32.mrb[0].mxu0
    %v458 = vpop.f32.mrb[0].mxu0
    %v459 = vpop.f32.mrb[0].mxu0
    %460 = vdwg.mxu0
    %v461 = vmax.f32 %v456, 0.0
    %v462 = vpack.c.bf16 %v461, %v461
    %v463 = vld [vmem:[%s5] sm:$0xf]
    %v464 = vld [vmem:[%s5 + $0x4] sm:$0xf]
    %v465 = vld [vmem:[%s5 + $0x8] sm:$0xf]
    %v466 = vld [vmem:[%s5 + $0xc] sm:$0xf]
    %v467 = vld [vmem:[%s5 + $0x10] sm:$0xf]
    %v468 = vld [vmem:[%s5 + $0x14] sm:$0xf]
    %v469 = vld [vmem:[%s5 + $0x18] sm:$0xf]
    %v470 = vld [vmem:[%s5 + $0x1c] sm:$0xf]
    %v471 = vld [vmem:[%s5 + $0x20] sm:$0xf]
    %v472 = vld [vmem:[%s5 + $0x24] sm:$0xf]
    %v473 = vld [vmem:[%s5 + $0x28] sm:$0xf]
    %v474 = vld [vmem:[%s5 + $0x2c] sm:$0xf]
    %v475 = vld [vmem:[%s5 + $0x30] sm:$0xf]
    %v476 = vld [vmem:[%s5 + $0x34] sm:$0xf]
    %v477 = vld [vmem:[%s5 + $0x38] sm:$0xf]
    %v478 = vld [vmem:[%s5 + $0x3c] sm:$0xf]
    %v479 = vld [vmem:[%s6] sm:$0x1]
    %v481 = vlaneseq
    %v482 = vshrl.u32 %v481, 7
    %v483 = vsub.s32 0, %v482
    %v484 = vrot.slane %v479, %v483
    %v502 = vunpack.c.l.b16 %v463
    %v503 = vunpack.c.l.b16 %v464
    %v504 = vunpack.c.l.b16 %v465
    %v505 = vunpack.c.l.b16 %v466
    %v506 = vunpack.c.l.b16 %v467
    %v507 = vunpack.c.l.b16 %v468
    %v508 = vunpack.c.l.b16 %v469
    %v509 = vunpack.c.l.b16 %v470
    %v510 = vunpack.c.l.b16 %v471
    %v511 = vunpack.c.l.b16 %v472
    %v512 = vunpack.c.l.b16 %v473
    %v513 = vunpack.c.l.b16 %v474
    %v514 = vunpack.c.l.b16 %v475
    %v515 = vunpack.c.l.b16 %v476
    %v516 = vunpack.c.l.b16 %v477
    %v517 = vunpack.c.l.b16 %v478
    %v518 = vpack.c.b16 %v503, %v502
    %v519 = vpack.c.b16 %v505, %v504
    %v520 = vpack.c.b16 %v507, %v506
    %v521 = vpack.c.b16 %v509, %v508
    %v522 = vpack.c.b16 %v511, %v510
    %v523 = vpack.c.b16 %v513, %v512
    %v524 = vpack.c.b16 %v515, %v514
    %v525 = vpack.c.b16 %v517, %v516
    %534 = vmatprep.subr.bf16.mxu0 0
    %535 = vmatpush1.bf16.msra.mxu0 %v518
    %536 = vmatprep.subr.bf16.mxu0 0
    %537 = vmatpush1.bf16.msra.mxu0 %v519
    %538 = vmatprep.subr.bf16.mxu0 0
    %539 = vmatpush1.bf16.msra.mxu0 %v520
    %540 = vmatprep.subr.bf16.mxu0 0
    %541 = vmatpush1.bf16.msra.mxu0 %v521
    %542 = vmatprep.subr.bf16.mxu0 0
    %543 = vmatpush1.bf16.msra.mxu0 %v522
    %544 = vmatprep.subr.bf16.mxu0 0
    %545 = vmatpush1.bf16.msra.mxu0 %v523
    %546 = vmatprep.subr.bf16.mxu0 0
    %547 = vmatpush1.bf16.msra.mxu0 %v524
    %548 = vmatprep.subr.bf16.mxu0 0
    %549 = vmatpush1.bf16.msra.mxu0 %v525
    %550 = vmatprep.subr.bf16.mxu0 0
    %551 = vmatpush1.bf16.msra.mxu0 0
    %552 = vmatprep.subr.bf16.mxu0 0
    %553 = vmatpush1.bf16.msra.mxu0 0
    %554 = vmatprep.subr.bf16.mxu0 0
    %555 = vmatpush1.bf16.msra.mxu0 0
    %556 = vmatprep.subr.bf16.mxu0 0
    %557 = vmatpush1.bf16.msra.mxu0 0
    %558 = vmatprep.subr.bf16.mxu0 0
    %559 = vmatpush1.bf16.msra.mxu0 0
    %560 = vmatprep.subr.bf16.mxu0 0
    %561 = vmatpush1.bf16.msra.mxu0 0
    %562 = vmatprep.subr.bf16.mxu0 0
    %563 = vmatpush1.bf16.msra.mxu0 0
    %564 = vmatprep.subr.bf16.mxu0 0
    %565 = vmatpush1.bf16.msra.mxu0 0
    %566 = vmatprep.mubr.bf16.mxu0 0
    %567 = vmatmul.mubr.bf16.gmra.mrb[0].mxu0 %v462
    %v568 = vpop.f32.mrb[0].mxu0
    %v569 = vadd.f32 %v484, %v568
    %v570 = vpop.f32.mrb[0].mxu0
    %v571 = vpop.f32.mrb[0].mxu0
    %v572 = vpop.f32.mrb[0].mxu0
    %573 = vdwg.mxu0
    %v574 = vlaneseq
    %v575 = vand.u32 %v574, 127
    %vm576 = vcmp.lt.s32.totalorder %v575, 10
    %v577 = vsel %vm576, %v569, -1e+30
    %vm578 = vcmask 1041408
    %v579 = vsel %vm578, %v577, -inf
    %580 = vmax.xlane.f32.xlu0 %v579
    %v581 = vpop.xlane.xlu0 %580
    %v582 = vsub.f32 %v577, %v581
    %v583 = vmul.f32 %v582, 1.442695
    %v584 = vpow.pop %v583
    %v585 = vsel %vm578, %v584, 0.0
    %586 = vadd.xlane.f32.xlu0 %v585
    %v587 = vpop.xlane.xlu0 %586
    %v588 = vlog2.pop %v587
    %v589 = vmul.f32 %v588, 0.6931472
    %v590 = vsub.f32 %v582, %v589
    %591 = vst [vmem:[#allocation2] sm:$0x3] %v590
    // Predicated region
    $region30: #{net_cifar10_forward.5} parent=1 // pred_check
      _
    $region31: #{net_cifar10_forward.5} parent=1 // pred_check_branch
      %593 = sbr.rel (0) target = $region33
    $region32: #{net_cifar10_forward.5} parent=1 // pred_region
      %s595 = ssub.s32 32, 32
      %596 = vsyncadd [#allocation3], %s595
      %s598 = sshll.u32 [#allocation2], 4
      %s599 = int_to_ptr.vmem [resolvable:$true] %s598
      %601 = dma.vmem_to_hbm [thread:$0]  %s599, 32, %s7, [#allocation3]
    $region33: #{net_cifar10_forward.5} parent=1 // pred_fallthru
      _
    // Predicated region
    $region34: #{net_cifar10_forward.5} parent=1 // pred_check
      _
    $region35: #{net_cifar10_forward.5} parent=1 // pred_check_branch
      %603 = sbr.rel (0) target = $region37
    $region36: #{net_cifar10_forward.5} parent=1 // pred_region
      %604 = dma.done [#allocation3], 32
    $region37: #{net_cifar10_forward.5} parent=1 // pred_fallthru
      _
    %605 = vsyncpa [#allocation3], 1

</llo_original>
